<compile_context>
chip_gen: v7x
topology: tpu7x:2x2x1
jax: 0.10.0
libtpu: 0.0.40
codegen_flags: <defaults>
</compile_context>

<pallas_src>
import numpy as np

import jax
import jax.numpy as jnp
from jax.experimental import pallas as pl
from jax.experimental.pallas import tpu as pltpu


# ---------------------------------------------------------------------------
# Interpolation matrices (host-side constants, match PyTorch align_corners=False)
# ---------------------------------------------------------------------------
def _bilinear_1d_matrix(in_size, out_size):
    """(out, in) bilinear resize operator, half-pixel centers, edge-clamped."""
    if in_size == out_size:
        return np.eye(out_size, dtype=np.float64)
    o = np.arange(out_size, dtype=np.float64)
    src = (o + 0.5) * (in_size / out_size) - 0.5
    src = np.clip(src, 0.0, in_size - 1)
    i0 = np.clip(np.floor(src).astype(np.int64), 0, in_size - 1)
    i1 = np.minimum(i0 + 1, in_size - 1)
    w1 = src - i0
    w0 = 1.0 - w1
    a = np.zeros((out_size, in_size), dtype=np.float64)
    a[np.arange(out_size), i0] += w0
    a[np.arange(out_size), i1] += w1
    return a


def _bilinear_2d_matrix_t(in_hw, out_hw):
    """Transposed full 2-D interpolation matrix, shape (Hi*Wi, Ho*Wo)."""
    ah = _bilinear_1d_matrix(in_hw[0], out_hw[0])     # (Ho, Hi)
    aw = _bilinear_1d_matrix(in_hw[1], out_hw[1])     # (Wo, Wi)
    b = np.kron(ah, aw)                               # (Ho*Wo, Hi*Wi), row-major flatten
    return jnp.asarray(b.T, dtype=jnp.float32)


def _pick_row_block(h, w):
    """Largest row-strip height that divides H, keeps >=2 strips, and makes the
    flattened strip (th*w) a multiple of 128 lanes. Falls back to the full image."""
    for th in range(h - 1, 0, -1):
        if h % th == 0 and (th * w) % 128 == 0:
            return th
    return h


# ---------------------------------------------------------------------------
# Kernel
# ---------------------------------------------------------------------------
def _make_side_head_kernel(num_sides):
    K = num_sides

    def kernel(*refs):
        # refs = [scal(SMEM), x0, w0, (x_i, w_i, bt_i) for i=1..K-1, ps_0..ps_{K-1}, p]
        n_in = 3 + 3 * (K - 1)
        scal_ref = refs[0]
        in_refs = refs[1:n_in]
        out_refs = refs[n_in:]
        ps_refs = out_refs[:K]
        p_ref = out_refs[K]

        # --- side 0 (already at target resolution): 1x1 conv = sublane reduce -------
        x0 = in_refs[0][0]                                    # (C0, TP), pixels on lanes
        w0 = in_refs[1][...]                                  # (C0, 1)
        ps0 = jnp.sum(x0 * w0, axis=0, keepdims=True) + scal_ref[0]      # (1, TP)
        ps_refs[0][0] = ps0.astype(ps_refs[0].dtype)
        acc = ps0 * scal_ref[K]                               # fuse weight 0

        # --- deeper sides: fused bilinear upsample (one MXU matmul) + 1x1 conv ------
        for i in range(1, K):
            xi = in_refs[2 + 3 * (i - 1)][0]                  # (C_i, P_i)
            wi = in_refs[3 + 3 * (i - 1)][...]                # (C_i, 1)
            bt = in_refs[4 + 3 * (i - 1)][...]                # (P_i, TP) interp strip
            up = jnp.dot(xi, bt,
                         preferred_element_type=jnp.float32,
                         precision=jax.lax.Precision.HIGHEST)  # (C_i, TP)
            psi = jnp.sum(up * wi, axis=0, keepdims=True) + scal_ref[i]   # (1, TP)
            ps_refs[i][0] = psi.astype(ps_refs[i].dtype)
            acc = acc + psi * scal_ref[K + i]

        p_ref[0] = (acc + scal_ref[2 * K]).astype(p_ref.dtype)

    return kernel


# ---------------------------------------------------------------------------
# Wrapper
# ---------------------------------------------------------------------------
def side_head(params, cs):
    """Pallas SideHead forward.

    params: 'side_w' (list of (C_i,) BN-folded 1x1 conv weights), 'side_b' ((K,)),
            'fuse_w' ((K,)), 'fuse_b' (scalar).
    cs: list of NCHW feature maps; cs[0] sets the output resolution.
    Returns (ps, p): list of (N,1,H0,W0) side maps and the fused (N,1,H0,W0) map.
    """
    K = len(cs)
    N, C0, H0, W0 = cs[0].shape
    P0 = H0 * W0
    th = _pick_row_block(H0, W0)
    T = H0 // th
    TP = th * W0

    # All scalar parameters live in SMEM: [b_0..b_{K-1}, fw_0..fw_{K-1}, fb]
    scal = jnp.concatenate([
        jnp.asarray(params["side_b"], jnp.float32).reshape(K),
        jnp.asarray(params["fuse_w"], jnp.float32).reshape(K),
        jnp.asarray(params["fuse_b"], jnp.float32).reshape(1),
    ])

    inputs = [scal]
    in_specs = [pl.BlockSpec(memory_space=pltpu.MemorySpace.SMEM)]

    # Side 0: strip-blocked along the flattened (lane-dense) pixel axis.
    x0 = cs[0].reshape(N, C0, P0).astype(jnp.float32)
    inputs += [x0, jnp.asarray(params["side_w"][0], jnp.float32).reshape(C0, 1)]
    in_specs += [
        pl.BlockSpec((1, C0, TP), lambda n, t: (n, 0, t)),
        pl.BlockSpec((C0, 1), lambda n, t: (0, 0)),
    ]

    # Deeper sides: full (small) map per batch + column-strip of the interp matrix.
    for i in range(1, K):
        _, Ci, Hi, Wi = cs[i].shape
        Pi = Hi * Wi
        xi = cs[i].reshape(N, Ci, Pi).astype(jnp.float32)
        wi = jnp.asarray(params["side_w"][i], jnp.float32).reshape(Ci, 1)
        bt = _bilinear_2d_matrix_t((Hi, Wi), (H0, W0))        # (Pi, P0)
        inputs += [xi, wi, bt]
        in_specs += [
            pl.BlockSpec((1, Ci, Pi), lambda n, t: (n, 0, 0)),
            pl.BlockSpec((Ci, 1), lambda n, t: (0, 0)),
            pl.BlockSpec((Pi, TP), lambda n, t: (0, t)),
        ]

    out_shape = tuple(jax.ShapeDtypeStruct((N, 1, P0), jnp.float32)
                      for _ in range(K + 1))
    out_specs = tuple(pl.BlockSpec((1, 1, TP), lambda n, t: (n, 0, t))
                      for _ in range(K + 1))

    outs = pl.pallas_call(
        _make_side_head_kernel(K),
        out_shape=out_shape,
        grid=(N, T),
        in_specs=in_specs,
        out_specs=out_specs,
        compiler_params=pltpu.CompilerParams(
            dimension_semantics=("parallel", "parallel")),
    )(*inputs)

    ps = [o.reshape(N, 1, H0, W0) for o in outs[:K]]
    p = outs[K].reshape(N, 1, H0, W0)
    return ps, p


# ---------------------------------------------------------------------------
# Parameters (synthetic; BN folded), pure-JAX reference, test
# ---------------------------------------------------------------------------
def init_params(key, side_in_channels):
    K = len(side_in_channels)
    ks = jax.random.split(key, K)
    side_w, side_b = [], []
    for k, c in zip(ks, side_in_channels):
        kw, kg, kb, km, kv = jax.random.split(k, 5)
        conv_w = jax.random.normal(kw, (c,), jnp.float32) / jnp.sqrt(float(c))
        gamma = 1.0 + 0.1 * jax.random.normal(kg, (), jnp.float32)
        beta = 0.1 * jax.random.normal(kb, (), jnp.float32)
        mean = 0.1 * jax.random.normal(km, (), jnp.float32)
        var = jnp.abs(jax.random.normal(kv, (), jnp.float32)) + 1.0
        scale = gamma / jnp.sqrt(var + 1e-5)
        side_w.append(conv_w * scale)          # fold BN scale into the conv weight
        side_b.append(beta - mean * scale)     # folded BN bias
    return {
        "side_w": side_w,
        "side_b": jnp.stack(side_b),
        "fuse_w": jnp.full((K,), 1.0 / K, jnp.float32),   # matches nn.init.constant_
        "fuse_b": jnp.zeros((), jnp.float32),
    }


def _reference_forward(params, cs):
    """Pure-JAX reference (independent of the kernel's interpolation matrices)."""
    H0, W0 = cs[0].shape[2], cs[0].shape[3]
    ps = []
    for i, c in enumerate(cs):
        w = params["side_w"][i].reshape(1, -1, 1, 1)
        p = jnp.sum(c * w, axis=1, keepdims=True) + params["side_b"][i]   # (N,1,H,W)
        if i > 0:
            p = jax.image.resize(p, (p.shape[0], 1, H0, W0), method="bilinear")
        ps.append(p)
    stacked = jnp.stack(ps, axis=0)                                       # (K,N,1,H0,W0)
    fw = params["fuse_w"].reshape(-1, 1, 1, 1, 1)
    p = jnp.sum(stacked * fw, axis=0) + params["fuse_b"]
    return ps, p


if __name__ == "__main__":
    key = jax.random.PRNGKey(0)
    k0, k1, k2, kp = jax.random.split(key, 4)

    N = 2
    side_in_channels = (4, 8, 16)
    H0 = W0 = 16
    # Typical side-head inputs: finest level full-res, deeper levels smaller.
    cs = [
        jax.random.normal(k0, (N, side_in_channels[0], H0, W0), jnp.float32),
        jax.random.normal(k1, (N, side_in_channels[1], H0 // 2, W0 // 2), jnp.float32),
        jax.random.normal(k2, (N, side_in_channels[2], H0 // 4, W0 // 4), jnp.float32),
    ]
    params = init_params(kp, side_in_channels)

    ps, p = side_head(params, cs)
    p = jax.block_until_ready(p)
    ps = [jax.block_until_ready(x) for x in ps]

    ps_ref, p_ref = _reference_forward(params, cs)
    ps_ref = [jax.block_until_ready(x) for x in ps_ref]
    p_ref = jax.block_until_ready(p_ref)

    assert p.shape == (N, 1, H0, W0)
    for a, b in zip(ps, ps_ref):
        assert a.shape == b.shape
        assert jnp.allclose(a, b, atol=2e-4, rtol=2e-4), float(jnp.max(jnp.abs(a - b)))
    assert jnp.allclose(p, p_ref, atol=2e-4, rtol=2e-4), float(jnp.max(jnp.abs(p - p_ref)))

    print("KERNEL_OK")
</pallas_src>

<mosaic_0001>
module attributes {stable_mosaic.version = 11 : i64} {
  func.func @kernel(%arg0: i32, %arg1: i32, %arg2: memref<7xf32, #tpu.memory_space<smem>>, %arg3: memref<1x4x128xf32, #tpu.memory_space<vmem>>, %arg4: memref<4x1xf32, #tpu.memory_space<vmem>>, %arg5: memref<1x8x64xf32, #tpu.memory_space<vmem>>, %arg6: memref<8x1xf32, #tpu.memory_space<vmem>>, %arg7: memref<64x128xf32, #tpu.memory_space<vmem>>, %arg8: memref<1x16x16xf32, #tpu.memory_space<vmem>>, %arg9: memref<16x1xf32, #tpu.memory_space<vmem>>, %arg10: memref<16x128xf32, #tpu.memory_space<vmem>>, %arg11: memref<1x1x128xf32, #tpu.memory_space<vmem>>, %arg12: memref<1x1x128xf32, #tpu.memory_space<vmem>>, %arg13: memref<1x1x128xf32, #tpu.memory_space<vmem>>, %arg14: memref<1x1x128xf32, #tpu.memory_space<vmem>>) attributes {dimension_semantics = [#tpu.dimension_semantics<parallel>, #tpu.dimension_semantics<parallel>], iteration_bounds = array<i64: 2, 2>, scalar_prefetch = 0 : i64, scratch_operands = 0 : i64, tpu.core_type = #tpu.core_type<tc>, window_params = [{transform_indices = @transform_0, window_bounds = array<i64: 7>}, {transform_indices = @transform_1, window_bounds = array<i64: 1, 4, 128>}, {pipeline_mode = #tpu.pipeline_mode<synchronous>, transform_indices = @transform_2, window_bounds = array<i64: 4, 1>}, {transform_indices = @transform_3, window_bounds = array<i64: 1, 8, 64>}, {pipeline_mode = #tpu.pipeline_mode<synchronous>, transform_indices = @transform_4, window_bounds = array<i64: 8, 1>}, {transform_indices = @transform_5, window_bounds = array<i64: 64, 128>}, {transform_indices = @transform_6, window_bounds = array<i64: 1, 16, 16>}, {pipeline_mode = #tpu.pipeline_mode<synchronous>, transform_indices = @transform_7, window_bounds = array<i64: 16, 1>}, {transform_indices = @transform_8, window_bounds = array<i64: 16, 128>}, {transform_indices = @transform_9, window_bounds = array<i64: 1, 1, 128>}, {transform_indices = @transform_10, window_bounds = array<i64: 1, 1, 128>}, {transform_indices = @transform_11, window_bounds = array<i64: 1, 1, 128>}, {transform_indices = @transform_12, window_bounds = array<i64: 1, 1, 128>}]} {
    %c0 = arith.constant 0 : index
    %c0_0 = arith.constant 0 : index
    %c0_1 = arith.constant 0 : index
    %0 = vector.load %arg3[%c0, %c0_0, %c0_1] : memref<1x4x128xf32, #tpu.memory_space<vmem>>, vector<1x4x128xf32>
    %1 = vector.shape_cast %0 : vector<1x4x128xf32> to vector<4x128xf32>
    %c0_2 = arith.constant 0 : index
    %c0_3 = arith.constant 0 : index
    %2 = vector.load %arg4[%c0_2, %c0_3] : memref<4x1xf32, #tpu.memory_space<vmem>>, vector<4x1xf32>
    %3 = vector.broadcast %2 : vector<4x1xf32> to vector<4x128xf32>
    %4 = arith.mulf %1, %3 : vector<4x128xf32>
    %cst = arith.constant dense<0.000000e+00> : vector<128xf32>
    %5 = vector.multi_reduction <add>, %4, %cst [0] : vector<4x128xf32> to vector<128xf32>
    %6 = vector.shape_cast %5 : vector<128xf32> to vector<1x128xf32>
    %c0_4 = arith.constant 0 : index
    %7 = memref.load %arg2[%c0_4] : memref<7xf32, #tpu.memory_space<smem>>
    %8 = vector.broadcast %7 : f32 to vector<1x128xf32>
    %9 = arith.addf %6, %8 : vector<1x128xf32>
    %c0_5 = arith.constant 0 : index
    %c0_6 = arith.constant 0 : index
    %c0_7 = arith.constant 0 : index
    %10 = vector.load %arg11[%c0_5, %c0_6, %c0_7] : memref<1x1x128xf32, #tpu.memory_space<vmem>>, vector<1x1x128xf32>
    %11 = vector.shape_cast %10 : vector<1x1x128xf32> to vector<1x128xf32>
    %12 = vector.shape_cast %9 : vector<1x128xf32> to vector<1x1x128xf32>
    tpu.vector_store %arg11[%c0_5, %c0_6, %c0_7], %12 {strides = array<i32>} : memref<1x1x128xf32, #tpu.memory_space<vmem>>, vector<1x1x128xf32>,
    %c3 = arith.constant 3 : index
    %13 = memref.load %arg2[%c3] : memref<7xf32, #tpu.memory_space<smem>>
    %14 = vector.broadcast %13 : f32 to vector<1x128xf32>
    %15 = arith.mulf %9, %14 : vector<1x128xf32>
    %c0_8 = arith.constant 0 : index
    %c0_9 = arith.constant 0 : index
    %c0_10 = arith.constant 0 : index
    %16 = vector.load %arg5[%c0_8, %c0_9, %c0_10] : memref<1x8x64xf32, #tpu.memory_space<vmem>>, vector<1x8x64xf32>
    %17 = vector.shape_cast %16 : vector<1x8x64xf32> to vector<8x64xf32>
    %c0_11 = arith.constant 0 : index
    %c0_12 = arith.constant 0 : index
    %18 = vector.load %arg6[%c0_11, %c0_12] : memref<8x1xf32, #tpu.memory_space<vmem>>, vector<8x1xf32>
    %c0_13 = arith.constant 0 : index
    %c0_14 = arith.constant 0 : index
    %19 = vector.load %arg7[%c0_13, %c0_14] : memref<64x128xf32, #tpu.memory_space<vmem>>, vector<64x128xf32>
    %cst_15 = arith.constant dense<0.000000e+00> : vector<8x128xf32>
    %20 = tpu.matmul %17, %19, %cst_15 {dimension_numbers = #tpu.dot_dimension_numbers<[1], [0], [0], [1], [0, 0, 1, 1], [], []>, precision = #tpu.contract_precision<fp32>} : vector<8x64xf32>, vector<64x128xf32>, vector<8x128xf32> -> vector<8x128xf32>
    %21 = vector.broadcast %18 : vector<8x1xf32> to vector<8x128xf32>
    %22 = arith.mulf %20, %21 : vector<8x128xf32>
    %cst_16 = arith.constant dense<0.000000e+00> : vector<128xf32>
    %23 = vector.multi_reduction <add>, %22, %cst_16 [0] : vector<8x128xf32> to vector<128xf32>
    %24 = vector.shape_cast %23 : vector<128xf32> to vector<1x128xf32>
    %c1 = arith.constant 1 : index
    %25 = memref.load %arg2[%c1] : memref<7xf32, #tpu.memory_space<smem>>
    %26 = vector.broadcast %25 : f32 to vector<1x128xf32>
    %27 = arith.addf %24, %26 : vector<1x128xf32>
    %c0_17 = arith.constant 0 : index
    %c0_18 = arith.constant 0 : index
    %c0_19 = arith.constant 0 : index
    %28 = vector.load %arg12[%c0_17, %c0_18, %c0_19] : memref<1x1x128xf32, #tpu.memory_space<vmem>>, vector<1x1x128xf32>
    %29 = vector.shape_cast %28 : vector<1x1x128xf32> to vector<1x128xf32>
    %30 = vector.shape_cast %27 : vector<1x128xf32> to vector<1x1x128xf32>
    tpu.vector_store %arg12[%c0_17, %c0_18, %c0_19], %30 {strides = array<i32>} : memref<1x1x128xf32, #tpu.memory_space<vmem>>, vector<1x1x128xf32>,
    %c4 = arith.constant 4 : index
    %31 = memref.load %arg2[%c4] : memref<7xf32, #tpu.memory_space<smem>>
    %32 = vector.broadcast %31 : f32 to vector<1x128xf32>
    %33 = arith.mulf %27, %32 : vector<1x128xf32>
    %34 = arith.addf %15, %33 : vector<1x128xf32>
    %c0_20 = arith.constant 0 : index
    %c0_21 = arith.constant 0 : index
    %c0_22 = arith.constant 0 : index
    %35 = vector.load %arg8[%c0_20, %c0_21, %c0_22] : memref<1x16x16xf32, #tpu.memory_space<vmem>>, vector<1x16x16xf32>
    %36 = vector.shape_cast %35 : vector<1x16x16xf32> to vector<16x16xf32>
    %c0_23 = arith.constant 0 : index
    %c0_24 = arith.constant 0 : index
    %37 = vector.load %arg9[%c0_23, %c0_24] : memref<16x1xf32, #tpu.memory_space<vmem>>, vector<16x1xf32>
    %c0_25 = arith.constant 0 : index
    %c0_26 = arith.constant 0 : index
    %38 = vector.load %arg10[%c0_25, %c0_26] : memref<16x128xf32, #tpu.memory_space<vmem>>, vector<16x128xf32>
    %cst_27 = arith.constant dense<0.000000e+00> : vector<16x128xf32>
    %39 = tpu.matmul %36, %38, %cst_27 {dimension_numbers = #tpu.dot_dimension_numbers<[1], [0], [0], [1], [0, 0, 1, 1], [], []>, precision = #tpu.contract_precision<fp32>} : vector<16x16xf32>, vector<16x128xf32>, vector<16x128xf32> -> vector<16x128xf32>
    %40 = vector.broadcast %37 : vector<16x1xf32> to vector<16x128xf32>
    %41 = arith.mulf %39, %40 : vector<16x128xf32>
    %cst_28 = arith.constant dense<0.000000e+00> : vector<128xf32>
    %42 = vector.multi_reduction <add>, %41, %cst_28 [0] : vector<16x128xf32> to vector<128xf32>
    %43 = vector.shape_cast %42 : vector<128xf32> to vector<1x128xf32>
    %c2 = arith.constant 2 : index
    %44 = memref.load %arg2[%c2] : memref<7xf32, #tpu.memory_space<smem>>
    %45 = vector.broadcast %44 : f32 to vector<1x128xf32>
    %46 = arith.addf %43, %45 : vector<1x128xf32>
    %c0_29 = arith.constant 0 : index
    %c0_30 = arith.constant 0 : index
    %c0_31 = arith.constant 0 : index
    %47 = vector.load %arg13[%c0_29, %c0_30, %c0_31] : memref<1x1x128xf32, #tpu.memory_space<vmem>>, vector<1x1x128xf32>
    %48 = vector.shape_cast %47 : vector<1x1x128xf32> to vector<1x128xf32>
    %49 = vector.shape_cast %46 : vector<1x128xf32> to vector<1x1x128xf32>
    tpu.vector_store %arg13[%c0_29, %c0_30, %c0_31], %49 {strides = array<i32>} : memref<1x1x128xf32, #tpu.memory_space<vmem>>, vector<1x1x128xf32>,
    %c5 = arith.constant 5 : index
    %50 = memref.load %arg2[%c5] : memref<7xf32, #tpu.memory_space<smem>>
    %51 = vector.broadcast %50 : f32 to vector<1x128xf32>
    %52 = arith.mulf %46, %51 : vector<1x128xf32>
    %53 = arith.addf %34, %52 : vector<1x128xf32>
    %c6 = arith.constant 6 : index
    %54 = memref.load %arg2[%c6] : memref<7xf32, #tpu.memory_space<smem>>
    %55 = vector.broadcast %54 : f32 to vector<1x128xf32>
    %56 = arith.addf %53, %55 : vector<1x128xf32>
    %c0_32 = arith.constant 0 : index
    %c0_33 = arith.constant 0 : index
    %c0_34 = arith.constant 0 : index
    %57 = vector.load %arg14[%c0_32, %c0_33, %c0_34] : memref<1x1x128xf32, #tpu.memory_space<vmem>>, vector<1x1x128xf32>
    %58 = vector.shape_cast %57 : vector<1x1x128xf32> to vector<1x128xf32>
    %59 = vector.shape_cast %56 : vector<1x128xf32> to vector<1x1x128xf32>
    tpu.vector_store %arg14[%c0_32, %c0_33, %c0_34], %59 {strides = array<i32>} : memref<1x1x128xf32, #tpu.memory_space<vmem>>, vector<1x1x128xf32>,
    return
  }
  func.func @transform_0(%arg0: i32, %arg1: i32) -> i32 {
    %c0_i32 = arith.constant 0 : i32
    %c0_i32_0 = arith.constant 0 : i32
    return %c0_i32 : i32
  }
  func.func @transform_1(%arg0: i32, %arg1: i32) -> (i32, i32, i32) {
    %c0_i32 = arith.constant 0 : i32
    %c0_i32_0 = arith.constant 0 : i32
    return %arg0, %c0_i32, %arg1 : i32, i32, i32
  }
  func.func @transform_2(%arg0: i32, %arg1: i32) -> (i32, i32) {
    %c0_i32 = arith.constant 0 : i32
    %c0_i32_0 = arith.constant 0 : i32
    %c0_i32_1 = arith.constant 0 : i32
    return %c0_i32, %c0_i32_0 : i32, i32
  }
  func.func @transform_3(%arg0: i32, %arg1: i32) -> (i32, i32, i32) {
    %c0_i32 = arith.constant 0 : i32
    %c0_i32_0 = arith.constant 0 : i32
    %c0_i32_1 = arith.constant 0 : i32
    return %arg0, %c0_i32, %c0_i32_0 : i32, i32, i32
  }
  func.func @transform_4(%arg0: i32, %arg1: i32) -> (i32, i32) {
    %c0_i32 = arith.constant 0 : i32
    %c0_i32_0 = arith.constant 0 : i32
    %c0_i32_1 = arith.constant 0 : i32
    return %c0_i32, %c0_i32_0 : i32, i32
  }
  func.func @transform_5(%arg0: i32, %arg1: i32) -> (i32, i32) {
    %c0_i32 = arith.constant 0 : i32
    %c0_i32_0 = arith.constant 0 : i32
    return %c0_i32, %arg1 : i32, i32
  }
  func.func @transform_6(%arg0: i32, %arg1: i32) -> (i32, i32, i32) {
    %c0_i32 = arith.constant 0 : i32
    %c0_i32_0 = arith.constant 0 : i32
    %c0_i32_1 = arith.constant 0 : i32
    return %arg0, %c0_i32, %c0_i32_0 : i32, i32, i32
  }
  func.func @transform_7(%arg0: i32, %arg1: i32) -> (i32, i32) {
    %c0_i32 = arith.constant 0 : i32
    %c0_i32_0 = arith.constant 0 : i32
    %c0_i32_1 = arith.constant 0 : i32
    return %c0_i32, %c0_i32_0 : i32, i32
  }
  func.func @transform_8(%arg0: i32, %arg1: i32) -> (i32, i32) {
    %c0_i32 = arith.constant 0 : i32
    %c0_i32_0 = arith.constant 0 : i32
    return %c0_i32, %arg1 : i32, i32
  }
  func.func @transform_9(%arg0: i32, %arg1: i32) -> (i32, i32, i32) {
    %c0_i32 = arith.constant 0 : i32
    %c0_i32_0 = arith.constant 0 : i32
    return %arg0, %c0_i32, %arg1 : i32, i32, i32
  }
  func.func @transform_10(%arg0: i32, %arg1: i32) -> (i32, i32, i32) {
    %c0_i32 = arith.constant 0 : i32
    %c0_i32_0 = arith.constant 0 : i32
    return %arg0, %c0_i32, %arg1 : i32, i32, i32
  }
  func.func @transform_11(%arg0: i32, %arg1: i32) -> (i32, i32, i32) {
    %c0_i32 = arith.constant 0 : i32
    %c0_i32_0 = arith.constant 0 : i32
    return %arg0, %c0_i32, %arg1 : i32, i32, i32
  }
  func.func @transform_12(%arg0: i32, %arg1: i32) -> (i32, i32, i32) {
    %c0_i32 = arith.constant 0 : i32
    %c0_i32_0 = arith.constant 0 : i32
    return %arg0, %c0_i32, %arg1 : i32, i32, i32
  }
}

</mosaic_0001>

<llo_original>
// kernel: tpu_custom_call.1
$region0: #{tpu_custom_call.1}
  #allocation0 [shape = 'u32[]', space=smem, size = 0x4, offset = 0x4, fixed_abs, tag = 'smem constant byte address 0x4 - core index']
  #allocation1 [shape = 'u32[144,128]{1,0:T(1,128)}', space=vmem, size = 0x12000, scoped, tag = 'internal scratch']
  %s0 = inlined_call_operand.vmem [shape: f32[7], index: 0, kind: input, shape index: {}]
  %s1 = inlined_call_operand.vmem [shape: f32[2,4,256], index: 1, kind: input, shape index: {}]
  %s2 = inlined_call_operand.vmem [shape: f32[4,1], index: 2, kind: input, shape index: {}]
  %s3 = inlined_call_operand.hbm [shape: f32[2,8,64], index: 3, kind: input, shape index: {}]
  %s4 = inlined_call_operand.vmem [shape: f32[8,1], index: 4, kind: input, shape index: {}]
  %s5 = inlined_call_operand.hbm [shape: f32[64,256], index: 5, kind: input, shape index: {}]
  %s6 = inlined_call_operand.vmem [shape: f32[2,16,16], index: 6, kind: input, shape index: {}]
  %s7 = inlined_call_operand.vmem [shape: f32[16,1], index: 7, kind: input, shape index: {}]
  %s8 = inlined_call_operand.hbm [shape: f32[16,256], index: 8, kind: input, shape index: {}]
  %s9 = inlined_call_operand.hbm [shape: f32[2,1,256], index: 9, kind: output, shape index: {0}]
  %s10 = inlined_call_operand.hbm [shape: f32[2,1,256], index: 10, kind: output, shape index: {1}]
  %s11 = inlined_call_operand.hbm [shape: f32[2,1,256], index: 11, kind: output, shape index: {2}]
  %s12 = inlined_call_operand.hbm [shape: f32[2,1,256], index: 12, kind: output, shape index: {3}]
  %13 = xla_tuple %s9, %s10, %s11, %s12
  %s14 = sld [smem:[#allocation0]]
  $region109: #{tpu_custom_call.1} parent=0
    _
  %s16 = ssub.s32 1, %s14
  %s17 = scalar_select 0, %s16, %s14
  $region1: #{tpu_custom_call.1} parent=0
    #allocation2 [shape = 'u8[512]{0}', space=smem, size = 0x200, scoped, tag = 'input window, operand 0, single buffered']
    #allocation3 [shape = 's32[2]{0}', space=sflag, size = 0x8, scoped, tag = 'scoped memory for tpu_custom_call.1']
    #allocation4 [shape = 's32[2]{0}', space=sflag, size = 0x8, scoped, tag = 'scoped memory for tpu_custom_call.1']
    #allocation5 [shape = 's32[2]{0}', space=sflag, size = 0x8, scoped, tag = 'scoped memory for tpu_custom_call.1']
    #allocation6 [shape = 'u8[8192]{0}', space=vmem, size = 0x2000, scoped, tag = 'input window, operand 3']
    #allocation7 [shape = 'u8[65536]{0}', space=vmem, size = 0x10000, scoped, tag = 'input window, operand 5']
    #allocation8 [shape = 's32[2]{0}', space=sflag, size = 0x8, scoped, tag = 'scoped memory for tpu_custom_call.1']
    #allocation9 [shape = 'u8[16384]{0}', space=vmem, size = 0x4000, scoped, tag = 'input window, operand 8']
    #allocation10 [shape = 'u8[1024]{0}', space=vmem, size = 0x400, scoped, tag = 'output window, operand 0']
    #allocation11 [shape = 'u8[1024]{0}', space=vmem, size = 0x400, scoped, tag = 'output window, operand 1']
    #allocation12 [shape = 's32[2]{0}', space=sflag, size = 0x8, scoped, tag = 'scoped memory for tpu_custom_call.1']
    #allocation13 [shape = 'u8[1024]{0}', space=vmem, size = 0x400, scoped, tag = 'output window, operand 2']
    #allocation14 [shape = 'u8[1024]{0}', space=vmem, size = 0x400, scoped, tag = 'output window, operand 3']
    #allocation15 [shape = 's32[2]{0}', space=sflag, size = 0x8, scoped, tag = 'scoped memory for tpu_custom_call.1']
    %18 = vsyncpa [#allocation5], 0
    %19 = vsyncpa [#allocation3], 0
    %s20 = scalar_lea.sflag [#allocation3], 1
    %21 = vsyncpa %s20, 0
    %22 = vsyncpa [#allocation8], 0
    %s23 = scalar_lea.sflag [#allocation8], 1
    %24 = vsyncpa %s23, 0
    %25 = vsyncpa [#allocation4], 0
    %s26 = scalar_lea.sflag [#allocation4], 1
    %27 = vsyncpa %s26, 0
    %28 = vsyncpa [#allocation12], 0
    %s29 = scalar_lea.sflag [#allocation12], 1
    %30 = vsyncpa %s29, 0
    %31 = vsyncpa [#allocation15], 0
    %s32 = scalar_lea.sflag [#allocation15], 1
    %33 = vsyncpa %s32, 0
    loop: start=0, step=1, limit=6
    $region2: #{tpu_custom_call.1} parent=1 // loop_pre_header
      _
    $region3: #{tpu_custom_call.1} parent=1 // loop_header
      %s35 = sphi 0, %s39
      %p36 = scmp.ge.s32.totalorder %s35, 6
      %s42 = sphi 0, %s54
      %s43 = sphi 0, %s50
      %s44 = sphi 0, %s42
      %s45 = sphi 0, %s43
      %s46 = sphi 0, %s44
      %s47 = sphi 0, %s45
      %s55 = sphi 0, %s55
      %s57 = sphi 0, %s55
      %s58 = sphi 0, %s57
      %s72 = sphi 0, %s58
      %s80 = sphi 0, %s82
      %s83 = sphi 0, %s80
      %s84 = sphi 0, %s83
      %s100 = sphi 0, %s84
      %s104 = sphi 0, %s104
      %s106 = sphi 0, %s104
      %s107 = sphi 0, %s106
      %s121 = sphi 0, %s107
      %s127 = sphi 0, %s129
      %s130 = sphi 0, %s127
      %s131 = sphi 0, %s130
      %s147 = sphi 0, %s131
      %s151 = sphi 0, %s151
      %s153 = sphi 0, %s151
      %s154 = sphi 0, %s153
      %s168 = sphi 0, %s154
      %s174 = sphi 0, %s176
      %s177 = sphi 0, %s174
      %s178 = sphi 0, %s177
      %s194 = sphi 0, %s178
      %s200 = sphi 0, %s202
      %s203 = sphi 0, %s200
      %s204 = sphi 0, %s203
      %s220 = sphi 0, %s204
      %s224 = sphi 0, %s224
      %s226 = sphi 0, %s224
      %s227 = sphi 0, %s226
      %s241 = sphi 0, %s227
      %s247 = sphi 0, %s249
      %s250 = sphi 0, %s247
      %s251 = sphi 0, %s250
      %s267 = sphi 0, %s251
      %s275 = sphi 0, %s277
      %s278 = sphi 0, %s275
      %s279 = sphi 0, %s278
      %s295 = sphi 0, %s279
      %s303 = sphi 0, %s305
      %s306 = sphi 0, %s303
      %s307 = sphi 0, %s306
      %s323 = sphi 0, %s307
      %s331 = sphi 0, %s333
      %s334 = sphi 0, %s331
      %s335 = sphi 0, %s334
      %s351 = sphi 0, %s335
      %s359 = sphi 0, %s361
      %s362 = sphi 0, %s359
      %s363 = sphi 0, %s362
      %s379 = sphi 0, %s363
    $region4: #{tpu_custom_call.1} parent=1 // loop_header_branch
      %38 = sbr.rel (%p36) target = $region8
    $region5: #{tpu_custom_call.1} parent=1 // loop_body
      %s40 = ssub.s32 %s35, 1
      %s41 = ssub.s32 %s35, 2
      %s48 = sadd.s32 1, %s43
      %p49 = scmp.ge.s32.totalorder %s48, 2
      %s50 = scalar_select %p49, 0, %s48
      %s51 = sadd.s32 1, %s42
      %s52 = scalar_select %p49, %s51, %s42
      %p53 = scmp.ge.s32.totalorder %s52, 2
      %s54 = scalar_select %p53, 0, %s52
      %s56 = sadd.s32 %s55, 1
      %p59 = scmp.eq.s32.totalorder %s35, 3
      %p60 = scmp.ne.s32.totalorder %s55, %s57
      %p61 = scmp.eq.s32.totalorder %s35, 0
      %p62 = por %p60, %p61
      %p63 = scmp.ne.s32.totalorder %s55, %s57
      %p64 = scmp.eq.s32.totalorder %s40, 3
      %p65 = por %p63, %p64
      %p66 = scmp.ne.s32.totalorder %s57, %s58
      %p67 = scmp.eq.s32.totalorder %s40, 0
      %p68 = por %p66, %p67
      %p69 = scmp.ne.s32.totalorder %s57, %s58
      %p70 = scmp.eq.s32.totalorder %s41, 3
      %p71 = por %p69, %p70
      %p73 = scmp.ne.s32.totalorder %s58, %s72
      %p74 = scmp.eq.s32.totalorder %s41, 0
      %p75 = por %p73, %p74
      %s76 = ssub.s32 %s42, %s54
      %s77 = ssub.s32 %s43, %s50
      %s78 = sor.u32 %s76, %s77
      %p79 = scmp.eq.s32.totalorder %s78, 0
      %s81 = sadd.s32 %s80, 1
      %s82 = scalar_select %p79, %s80, %s81
      %p85 = pneg %p79
      %p86 = scmp.eq.s32.totalorder %s35, 3
      %p87 = por %p85, %p86
      %p88 = scmp.ne.s32.totalorder %s80, %s83
      %p89 = scmp.eq.s32.totalorder %s35, 0
      %p90 = por %p88, %p89
      %p91 = scmp.ne.s32.totalorder %s80, %s83
      %p92 = scmp.eq.s32.totalorder %s40, 3
      %p93 = por %p91, %p92
      %p94 = scmp.ne.s32.totalorder %s83, %s84
      %p95 = scmp.eq.s32.totalorder %s40, 0
      %p96 = por %p94, %p95
      %p97 = scmp.ne.s32.totalorder %s83, %s84
      %p98 = scmp.eq.s32.totalorder %s41, 3
      %p99 = por %p97, %p98
      %p101 = scmp.ne.s32.totalorder %s84, %s100
      %p102 = scmp.eq.s32.totalorder %s41, 0
      %p103 = por %p101, %p102
      %s105 = sadd.s32 %s104, 1
      %p108 = scmp.eq.s32.totalorder %s35, 3
      %p109 = scmp.ne.s32.totalorder %s104, %s106
      %p110 = scmp.eq.s32.totalorder %s35, 0
      %p111 = por %p109, %p110
      %p112 = scmp.ne.s32.totalorder %s104, %s106
      %p113 = scmp.eq.s32.totalorder %s40, 3
      %p114 = por %p112, %p113
      %p115 = scmp.ne.s32.totalorder %s106, %s107
      %p116 = scmp.eq.s32.totalorder %s40, 0
      %p117 = por %p115, %p116
      %p118 = scmp.ne.s32.totalorder %s106, %s107
      %p119 = scmp.eq.s32.totalorder %s41, 3
      %p120 = por %p118, %p119
      %p122 = scmp.ne.s32.totalorder %s107, %s121
      %p123 = scmp.eq.s32.totalorder %s41, 0
      %p124 = por %p122, %p123
      %s125 = ssub.s32 %s42, %s54
      %p126 = scmp.eq.s32.totalorder %s125, 0
      %s128 = sadd.s32 %s127, 1
      %s129 = scalar_select %p126, %s127, %s128
      %p132 = pneg %p126
      %p133 = scmp.eq.s32.totalorder %s35, 3
      %p134 = por %p132, %p133
      %p135 = scmp.ne.s32.totalorder %s127, %s130
      %p136 = scmp.eq.s32.totalorder %s35, 0
      %p137 = por %p135, %p136
      %p138 = scmp.ne.s32.totalorder %s127, %s130
      %p139 = scmp.eq.s32.totalorder %s40, 3
      %p140 = por %p138, %p139
      %p141 = scmp.ne.s32.totalorder %s130, %s131
      %p142 = scmp.eq.s32.totalorder %s40, 0
      %p143 = por %p141, %p142
      %p144 = scmp.ne.s32.totalorder %s130, %s131
      %p145 = scmp.eq.s32.totalorder %s41, 3
      %p146 = por %p144, %p145
      %p148 = scmp.ne.s32.totalorder %s131, %s147
      %p149 = scmp.eq.s32.totalorder %s41, 0
      %p150 = por %p148, %p149
      %s152 = sadd.s32 %s151, 1
      %p155 = scmp.eq.s32.totalorder %s35, 3
      %p156 = scmp.ne.s32.totalorder %s151, %s153
      %p157 = scmp.eq.s32.totalorder %s35, 0
      %p158 = por %p156, %p157
      %p159 = scmp.ne.s32.totalorder %s151, %s153
      %p160 = scmp.eq.s32.totalorder %s40, 3
      %p161 = por %p159, %p160
      %p162 = scmp.ne.s32.totalorder %s153, %s154
      %p163 = scmp.eq.s32.totalorder %s40, 0
      %p164 = por %p162, %p163
      %p165 = scmp.ne.s32.totalorder %s153, %s154
      %p166 = scmp.eq.s32.totalorder %s41, 3
      %p167 = por %p165, %p166
      %p169 = scmp.ne.s32.totalorder %s154, %s168
      %p170 = scmp.eq.s32.totalorder %s41, 0
      %p171 = por %p169, %p170
      %s172 = ssub.s32 %s43, %s50
      %p173 = scmp.eq.s32.totalorder %s172, 0
      %s175 = sadd.s32 %s174, 1
      %s176 = scalar_select %p173, %s174, %s175
      %p179 = pneg %p173
      %p180 = scmp.eq.s32.totalorder %s35, 3
      %p181 = por %p179, %p180
      %p182 = scmp.ne.s32.totalorder %s174, %s177
      %p183 = scmp.eq.s32.totalorder %s35, 0
      %p184 = por %p182, %p183
      %p185 = scmp.ne.s32.totalorder %s174, %s177
      %p186 = scmp.eq.s32.totalorder %s40, 3
      %p187 = por %p185, %p186
      %p188 = scmp.ne.s32.totalorder %s177, %s178
      %p189 = scmp.eq.s32.totalorder %s40, 0
      %p190 = por %p188, %p189
      %p191 = scmp.ne.s32.totalorder %s177, %s178
      %p192 = scmp.eq.s32.totalorder %s41, 3
      %p193 = por %p191, %p192
      %p195 = scmp.ne.s32.totalorder %s178, %s194
      %p196 = scmp.eq.s32.totalorder %s41, 0
      %p197 = por %p195, %p196
      %s198 = ssub.s32 %s42, %s54
      %p199 = scmp.eq.s32.totalorder %s198, 0
      %s201 = sadd.s32 %s200, 1
      %s202 = scalar_select %p199, %s200, %s201
      %p205 = pneg %p199
      %p206 = scmp.eq.s32.totalorder %s35, 3
      %p207 = por %p205, %p206
      %p208 = scmp.ne.s32.totalorder %s200, %s203
      %p209 = scmp.eq.s32.totalorder %s35, 0
      %p210 = por %p208, %p209
      %p211 = scmp.ne.s32.totalorder %s200, %s203
      %p212 = scmp.eq.s32.totalorder %s40, 3
      %p213 = por %p211, %p212
      %p214 = scmp.ne.s32.totalorder %s203, %s204
      %p215 = scmp.eq.s32.totalorder %s40, 0
      %p216 = por %p214, %p215
      %p217 = scmp.ne.s32.totalorder %s203, %s204
      %p218 = scmp.eq.s32.totalorder %s41, 3
      %p219 = por %p217, %p218
      %p221 = scmp.ne.s32.totalorder %s204, %s220
      %p222 = scmp.eq.s32.totalorder %s41, 0
      %p223 = por %p221, %p222
      %s225 = sadd.s32 %s224, 1
      %p228 = scmp.eq.s32.totalorder %s35, 3
      %p229 = scmp.ne.s32.totalorder %s224, %s226
      %p230 = scmp.eq.s32.totalorder %s35, 0
      %p231 = por %p229, %p230
      %p232 = scmp.ne.s32.totalorder %s224, %s226
      %p233 = scmp.eq.s32.totalorder %s40, 3
      %p234 = por %p232, %p233
      %p235 = scmp.ne.s32.totalorder %s226, %s227
      %p236 = scmp.eq.s32.totalorder %s40, 0
      %p237 = por %p235, %p236
      %p238 = scmp.ne.s32.totalorder %s226, %s227
      %p239 = scmp.eq.s32.totalorder %s41, 3
      %p240 = por %p238, %p239
      %p242 = scmp.ne.s32.totalorder %s227, %s241
      %p243 = scmp.eq.s32.totalorder %s41, 0
      %p244 = por %p242, %p243
      %s245 = ssub.s32 %s43, %s50
      %p246 = scmp.eq.s32.totalorder %s245, 0
      %s248 = sadd.s32 %s247, 1
      %s249 = scalar_select %p246, %s247, %s248
      %p252 = pneg %p246
      %p253 = scmp.eq.s32.totalorder %s35, 3
      %p254 = por %p252, %p253
      %p255 = scmp.ne.s32.totalorder %s247, %s250
      %p256 = scmp.eq.s32.totalorder %s35, 0
      %p257 = por %p255, %p256
      %p258 = scmp.ne.s32.totalorder %s247, %s250
      %p259 = scmp.eq.s32.totalorder %s40, 3
      %p260 = por %p258, %p259
      %p261 = scmp.ne.s32.totalorder %s250, %s251
      %p262 = scmp.eq.s32.totalorder %s40, 0
      %p263 = por %p261, %p262
      %p264 = scmp.ne.s32.totalorder %s250, %s251
      %p265 = scmp.eq.s32.totalorder %s41, 3
      %p266 = por %p264, %p265
      %p268 = scmp.ne.s32.totalorder %s251, %s267
      %p269 = scmp.eq.s32.totalorder %s41, 0
      %p270 = por %p268, %p269
      %s271 = ssub.s32 %s42, %s54
      %s272 = ssub.s32 %s43, %s50
      %s273 = sor.u32 %s271, %s272
      %p274 = scmp.eq.s32.totalorder %s273, 0
      %s276 = sadd.s32 %s275, 1
      %s277 = scalar_select %p274, %s275, %s276
      %p280 = pneg %p274
      %p281 = scmp.eq.s32.totalorder %s35, 3
      %p282 = por %p280, %p281
      %p283 = scmp.ne.s32.totalorder %s275, %s278
      %p284 = scmp.eq.s32.totalorder %s35, 0
      %p285 = por %p283, %p284
      %p286 = scmp.ne.s32.totalorder %s275, %s278
      %p287 = scmp.eq.s32.totalorder %s40, 3
      %p288 = por %p286, %p287
      %p289 = scmp.ne.s32.totalorder %s278, %s279
      %p290 = scmp.eq.s32.totalorder %s40, 0
      %p291 = por %p289, %p290
      %p292 = scmp.ne.s32.totalorder %s278, %s279
      %p293 = scmp.eq.s32.totalorder %s41, 3
      %p294 = por %p292, %p293
      %p296 = scmp.ne.s32.totalorder %s279, %s295
      %p297 = scmp.eq.s32.totalorder %s41, 0
      %p298 = por %p296, %p297
      %s299 = ssub.s32 %s42, %s54
      %s300 = ssub.s32 %s43, %s50
      %s301 = sor.u32 %s299, %s300
      %p302 = scmp.eq.s32.totalorder %s301, 0
      %s304 = sadd.s32 %s303, 1
      %s305 = scalar_select %p302, %s303, %s304
      %p308 = pneg %p302
      %p309 = scmp.eq.s32.totalorder %s35, 3
      %p310 = por %p308, %p309
      %p311 = scmp.ne.s32.totalorder %s303, %s306
      %p312 = scmp.eq.s32.totalorder %s35, 0
      %p313 = por %p311, %p312
      %p314 = scmp.ne.s32.totalorder %s303, %s306
      %p315 = scmp.eq.s32.totalorder %s40, 3
      %p316 = por %p314, %p315
      %p317 = scmp.ne.s32.totalorder %s306, %s307
      %p318 = scmp.eq.s32.totalorder %s40, 0
      %p319 = por %p317, %p318
      %p320 = scmp.ne.s32.totalorder %s306, %s307
      %p321 = scmp.eq.s32.totalorder %s41, 3
      %p322 = por %p320, %p321
      %p324 = scmp.ne.s32.totalorder %s307, %s323
      %p325 = scmp.eq.s32.totalorder %s41, 0
      %p326 = por %p324, %p325
      %s327 = ssub.s32 %s42, %s54
      %s328 = ssub.s32 %s43, %s50
      %s329 = sor.u32 %s327, %s328
      %p330 = scmp.eq.s32.totalorder %s329, 0
      %s332 = sadd.s32 %s331, 1
      %s333 = scalar_select %p330, %s331, %s332
      %p336 = pneg %p330
      %p337 = scmp.eq.s32.totalorder %s35, 3
      %p338 = por %p336, %p337
      %p339 = scmp.ne.s32.totalorder %s331, %s334
      %p340 = scmp.eq.s32.totalorder %s35, 0
      %p341 = por %p339, %p340
      %p342 = scmp.ne.s32.totalorder %s331, %s334
      %p343 = scmp.eq.s32.totalorder %s40, 3
      %p344 = por %p342, %p343
      %p345 = scmp.ne.s32.totalorder %s334, %s335
      %p346 = scmp.eq.s32.totalorder %s40, 0
      %p347 = por %p345, %p346
      %p348 = scmp.ne.s32.totalorder %s334, %s335
      %p349 = scmp.eq.s32.totalorder %s41, 3
      %p350 = por %p348, %p349
      %p352 = scmp.ne.s32.totalorder %s335, %s351
      %p353 = scmp.eq.s32.totalorder %s41, 0
      %p354 = por %p352, %p353
      %s355 = ssub.s32 %s42, %s54
      %s356 = ssub.s32 %s43, %s50
      %s357 = sor.u32 %s355, %s356
      %p358 = scmp.eq.s32.totalorder %s357, 0
      %s360 = sadd.s32 %s359, 1
      %s361 = scalar_select %p358, %s359, %s360
      %p364 = pneg %p358
      %p365 = scmp.eq.s32.totalorder %s35, 3
      %p366 = por %p364, %p365
      %p367 = scmp.ne.s32.totalorder %s359, %s362
      %p368 = scmp.eq.s32.totalorder %s35, 0
      %p369 = por %p367, %p368
      %p370 = scmp.ne.s32.totalorder %s359, %s362
      %p371 = scmp.eq.s32.totalorder %s40, 3
      %p372 = por %p370, %p371
      %p373 = scmp.ne.s32.totalorder %s362, %s363
      %p374 = scmp.eq.s32.totalorder %s40, 0
      %p375 = por %p373, %p374
      %p376 = scmp.ne.s32.totalorder %s362, %s363
      %p377 = scmp.eq.s32.totalorder %s41, 3
      %p378 = por %p376, %p377
      %p380 = scmp.ne.s32.totalorder %s363, %s379
      %p381 = scmp.eq.s32.totalorder %s41, 0
      %p382 = por %p380, %p381
      %p383 = scmp.le.s32.totalorder 1, %s35
      %p384 = scmp.lt.s32.totalorder %s35, 5
      %p385 = pnand %p383, %p384
      %p386 = pneg %p385
      // Predicated region
      $region9: #{tpu_custom_call.1} parent=5 // pred_check
        _
      $region10: #{tpu_custom_call.1} parent=5 // pred_check_branch
        %388 = sbr.rel (%p385) target = $region12
      $region11: #{tpu_custom_call.1} parent=5 // pred_region
        %s389 = ssub.s32 %s35, 1
        // Predicated region
        $region13: #{tpu_custom_call.1} parent=11 // pred_check
          %p390 = pneg %p68
        $region14: #{tpu_custom_call.1} parent=11 // pred_check_branch
          %392 = sbr.rel (%p390) target = $region16
        $region15: #{tpu_custom_call.1} parent=11 // pred_region
          %s394 = ssub.s32 16, 16
          %395 = vsyncadd [#allocation5], %s394
          %s397 = sshll.u32 %s0, 4
          %s398 = int_to_ptr.vmem [resolvable:$true] %s397
          %400 = dma.vmem_to_smem %s398, 16, [#allocation2], [#allocation5]
        $region16: #{tpu_custom_call.1} parent=11 // pred_fallthru
          _
        // Predicated region
        $region17: #{tpu_custom_call.1} parent=11 // pred_check
          %p401 = pneg %p117
        $region18: #{tpu_custom_call.1} parent=11 // pred_check_branch
          %403 = sbr.rel (%p401) target = $region20
        $region19: #{tpu_custom_call.1} parent=11 // pred_region
          _
        $region20: #{tpu_custom_call.1} parent=11 // pred_fallthru
          _
        // Predicated region
        $region21: #{tpu_custom_call.1} parent=11 // pred_check
          %p404 = pneg %p164
        $region22: #{tpu_custom_call.1} parent=11 // pred_check_branch
          %406 = sbr.rel (%p404) target = $region24
        $region23: #{tpu_custom_call.1} parent=11 // pred_region
          _
        $region24: #{tpu_custom_call.1} parent=11 // pred_fallthru
          _
        // Predicated region
        $region25: #{tpu_custom_call.1} parent=11 // pred_check
          %p407 = pneg %p237
        $region26: #{tpu_custom_call.1} parent=11 // pred_check_branch
          %409 = sbr.rel (%p407) target = $region28
        $region27: #{tpu_custom_call.1} parent=11 // pred_region
          _
        $region28: #{tpu_custom_call.1} parent=11 // pred_fallthru
          _
      $region12: #{tpu_custom_call.1} parent=5 // pred_fallthru
        _
      %p410 = scmp.lt.s32.totalorder %s35, 4
      // Predicated region
      $region29: #{tpu_custom_call.1} parent=5 // pred_check
        %p411 = pneg %p410
      $region30: #{tpu_custom_call.1} parent=5 // pred_check_branch
        %413 = sbr.rel (%p411) target = $region32
      $region31: #{tpu_custom_call.1} parent=5 // pred_region
        // Predicated region
        $region33: #{tpu_custom_call.1} parent=31 // pred_check
          %p414 = pneg %p90
        $region34: #{tpu_custom_call.1} parent=31 // pred_check_branch
          %416 = sbr.rel (%p414) target = $region36
        $region35: #{tpu_custom_call.1} parent=31 // pred_region
          %p417 = scmp.lt.s32.totalorder %s42, 1
          %s418 = scalar_select %p417, %s42, 1
          %p419 = scmp.lt.s32.totalorder %s43, 1
          %s420 = scalar_select %p419, %s43, 1
          %s421 = smul.addr %s418, 2
          %s422 = sadd.s32 %s420, %s421
          %s423 = smul.addr %s422, 4
          %s424 = scalar_lea.vmem %s1, %s423
        $region36: #{tpu_custom_call.1} parent=31 // pred_fallthru
          _
        // Predicated region
        $region37: #{tpu_custom_call.1} parent=31 // pred_check
          %p425 = pneg %p137
        $region38: #{tpu_custom_call.1} parent=31 // pred_check_branch
          %427 = sbr.rel (%p425) target = $region40
        $region39: #{tpu_custom_call.1} parent=31 // pred_region
          %s428 = sand.u32 %s127, 1
          %s429 = scalar_lea.sflag [#allocation3], %s428
          %s430 = sand.u32 %s127, 1
          %s431 = smul.addr %s430, 8
          %s432 = scalar_lea.vmem [#allocation6], %s431
          %s434 = ssub.s32 128, 128
          %435 = vsyncadd %s429, %s434
          %s436 = smul.addr %s42, 128
          %s437 = scalar_lea.hbm %s3, %s436
          %s439 = sshll.u32 %s432, 4
          %s440 = int_to_ptr.vmem [resolvable:$true] %s439
          %442 = dma.hbm_to_vmem [thread:$0]  %s437, 128, %s440, %s429
        $region40: #{tpu_custom_call.1} parent=31 // pred_fallthru
          _
        // Predicated region
        $region41: #{tpu_custom_call.1} parent=31 // pred_check
          %p443 = pneg %p184
        $region42: #{tpu_custom_call.1} parent=31 // pred_check_branch
          %445 = sbr.rel (%p443) target = $region44
        $region43: #{tpu_custom_call.1} parent=31 // pred_region
          %s446 = sand.u32 %s35, 1
          %s447 = scalar_lea.sflag [#allocation8], %s446
          %s448 = sand.u32 %s174, 1
          %s449 = smul.addr %s448, 64
          %s450 = scalar_lea.vmem [#allocation7], %s449
          %s452 = ssub.s32 1024, 1024
          %453 = vsyncadd %s447, %s452
          %s454 = smul.addr %s43, 128
          %s455 = scalar_lea.hbm %s5, %s454
          %s456 = sshll.u32 %s450, 4
          %s457 = int_to_ptr.vmem [resolvable:$true] %s456
          %462 = dma.hbm_to_vmem [thread:$0]  %s455, 1024, %s457, %s447, 256, 128, 8
        $region44: #{tpu_custom_call.1} parent=31 // pred_fallthru
          _
        // Predicated region
        $region45: #{tpu_custom_call.1} parent=31 // pred_check
          %p463 = pneg %p210
        $region46: #{tpu_custom_call.1} parent=31 // pred_check_branch
          %465 = sbr.rel (%p463) target = $region48
        $region47: #{tpu_custom_call.1} parent=31 // pred_region
          %p466 = scmp.lt.s32.totalorder %s42, 1
          %s467 = scalar_select %p466, %s42, 1
          %s468 = smul.addr %s467, 2
          %s469 = smul.addr %s468, 8
          %s470 = scalar_lea.vmem %s6, %s469
        $region48: #{tpu_custom_call.1} parent=31 // pred_fallthru
          _
        // Predicated region
        $region49: #{tpu_custom_call.1} parent=31 // pred_check
          %p471 = pneg %p257
        $region50: #{tpu_custom_call.1} parent=31 // pred_check_branch
          %473 = sbr.rel (%p471) target = $region52
        $region51: #{tpu_custom_call.1} parent=31 // pred_region
          %s474 = sand.u32 %s35, 1
          %s475 = scalar_lea.sflag [#allocation8], %s474
          %s476 = sand.u32 %s247, 1
          %s477 = smul.addr %s476, 16
          %s478 = scalar_lea.vmem [#allocation9], %s477
          %s480 = ssub.s32 256, 256
          %481 = vsyncadd %s475, %s480
          %s482 = smul.addr %s43, 128
          %s483 = scalar_lea.hbm %s8, %s482
          %s484 = sshll.u32 %s478, 4
          %s485 = int_to_ptr.vmem [resolvable:$true] %s484
          %490 = dma.hbm_to_vmem [thread:$0]  %s483, 256, %s485, %s475, 256, 128, 8
        $region52: #{tpu_custom_call.1} parent=31 // pred_fallthru
          _
      $region32: #{tpu_custom_call.1} parent=5 // pred_fallthru
        _
      %p491 = scmp.le.s32.totalorder 1, %s35
      %p492 = scmp.lt.s32.totalorder %s35, 5
      %p493 = pnand %p491, %p492
      %p494 = pneg %p493
      // Predicated region
      $region53: #{tpu_custom_call.1} parent=5 // pred_check
        _
      $region54: #{tpu_custom_call.1} parent=5 // pred_check_branch
        %496 = sbr.rel (%p493) target = $region56
      $region55: #{tpu_custom_call.1} parent=5 // pred_region
        %s497 = ssub.s32 %s35, 1
        // Predicated region
        $region57: #{tpu_custom_call.1} parent=55 // pred_check
          %p498 = pneg %p68
        $region58: #{tpu_custom_call.1} parent=55 // pred_check_branch
          %500 = sbr.rel (%p498) target = $region60
        $region59: #{tpu_custom_call.1} parent=55 // pred_region
          %501 = dma.done [#allocation5], 16
        $region60: #{tpu_custom_call.1} parent=55 // pred_fallthru
          _
        %s502 = sand.u32 %s130, 1
        %s503 = scalar_lea.sflag [#allocation3], %s502
        %s504 = sand.u32 %s130, 1
        %s505 = smul.addr %s504, 8
        %s506 = scalar_lea.vmem [#allocation6], %s505
        // Predicated region
        $region61: #{tpu_custom_call.1} parent=55 // pred_check
          %p507 = pneg %p143
        $region62: #{tpu_custom_call.1} parent=55 // pred_check_branch
          %509 = sbr.rel (%p507) target = $region64
        $region63: #{tpu_custom_call.1} parent=55 // pred_region
          %510 = dma.done %s503, 128
        $region64: #{tpu_custom_call.1} parent=55 // pred_fallthru
          _
        %s511 = sand.u32 %s40, 1
        %s512 = scalar_lea.sflag [#allocation8], %s511
        %s513 = sand.u32 %s177, 1
        %s514 = smul.addr %s513, 64
        %s515 = scalar_lea.vmem [#allocation7], %s514
        // Predicated region
        $region65: #{tpu_custom_call.1} parent=55 // pred_check
          %p516 = pneg %p190
        $region66: #{tpu_custom_call.1} parent=55 // pred_check_branch
          %518 = sbr.rel (%p516) target = $region68
        $region67: #{tpu_custom_call.1} parent=55 // pred_region
          %519 = dma.done %s512, 1024
        $region68: #{tpu_custom_call.1} parent=55 // pred_fallthru
          _
        %s520 = sand.u32 %s40, 1
        %s521 = scalar_lea.sflag [#allocation8], %s520
        %s522 = sand.u32 %s250, 1
        %s523 = smul.addr %s522, 16
        %s524 = scalar_lea.vmem [#allocation9], %s523
        // Predicated region
        $region69: #{tpu_custom_call.1} parent=55 // pred_check
          %p525 = pneg %p263
        $region70: #{tpu_custom_call.1} parent=55 // pred_check_branch
          %527 = sbr.rel (%p525) target = $region72
        $region71: #{tpu_custom_call.1} parent=55 // pred_region
          %528 = dma.done %s521, 256
        $region72: #{tpu_custom_call.1} parent=55 // pred_fallthru
          _
        %529 = sfence
        %p530 = pneg %p68
        %p531 = pneg %p65
        %p532 = scmp.lt.s32.totalorder %s44, 1
        %s533 = scalar_select %p532, %s44, 1
        %p534 = scmp.lt.s32.totalorder %s45, 1
        %s535 = scalar_select %p534, %s45, 1
        %s536 = smul.addr %s533, 2
        %s537 = sadd.s32 %s535, %s536
        %s538 = smul.addr %s537, 4
        %s539 = scalar_lea.vmem %s1, %s538
        %p540 = pneg %p96
        %p541 = pneg %p93
        %p542 = pneg %p117
        %p543 = pneg %p114
        %s544 = sand.u32 %s130, 1
        %s545 = scalar_lea.sflag [#allocation3], %s544
        %s546 = sand.u32 %s130, 1
        %s547 = smul.addr %s546, 8
        %s548 = scalar_lea.vmem [#allocation6], %s547
        %p549 = pneg %p143
        %p550 = pneg %p140
        %p551 = pneg %p164
        %p552 = pneg %p161
        %s553 = sand.u32 %s40, 1
        %s554 = scalar_lea.sflag [#allocation8], %s553
        %s555 = sand.u32 %s177, 1
        %s556 = smul.addr %s555, 64
        %s557 = scalar_lea.vmem [#allocation7], %s556
        %p558 = pneg %p190
        %p559 = pneg %p187
        %p560 = scmp.lt.s32.totalorder %s44, 1
        %s561 = scalar_select %p560, %s44, 1
        %s562 = smul.addr %s561, 2
        %s563 = smul.addr %s562, 8
        %s564 = scalar_lea.vmem %s6, %s563
        %p565 = pneg %p216
        %p566 = pneg %p213
        %p567 = pneg %p237
        %p568 = pneg %p234
        %s569 = sand.u32 %s40, 1
        %s570 = scalar_lea.sflag [#allocation8], %s569
        %s571 = sand.u32 %s250, 1
        %s572 = smul.addr %s571, 16
        %s573 = scalar_lea.vmem [#allocation9], %s572
        %p574 = pneg %p263
        %p575 = pneg %p260
        %p576 = pneg %p291
        %p577 = pneg %p288
        %s578 = sand.u32 %s278, 1
        %s579 = scalar_lea.sflag [#allocation4], %s578
        %s580 = sand.u32 %s278, 1
        %s581 = scalar_lea.vmem [#allocation10], %s580
        %p582 = pneg %p319
        %p583 = pneg %p316
        %s584 = sand.u32 %s40, 1
        %s585 = scalar_lea.sflag [#allocation12], %s584
        %s586 = sand.u32 %s306, 1
        %s587 = scalar_lea.vmem [#allocation11], %s586
        %p588 = pneg %p347
        %p589 = pneg %p344
        %s590 = sand.u32 %s40, 1
        %s591 = scalar_lea.sflag [#allocation12], %s590
        %s592 = sand.u32 %s334, 1
        %s593 = scalar_lea.vmem [#allocation13], %s592
        %p594 = pneg %p375
        %p595 = pneg %p372
        %s596 = sand.u32 %s362, 1
        %s597 = scalar_lea.sflag [#allocation15], %s596
        %s598 = sand.u32 %s362, 1
        %s599 = scalar_lea.vmem [#allocation14], %s598
        %p600 = scmp.lt.s32.totalorder %s44, 1
        %s601 = scalar_select %p600, %s44, 1
        %p602 = scmp.lt.s32.totalorder %s45, 1
        %s603 = scalar_select %p602, %s45, 1
        %s604 = smul.addr %s601, 2
        %s605 = sadd.s32 %s603, %s604
        %s606 = smul.addr %s605, 4
        %s607 = scalar_lea.vmem %s1, %s606
        %p608 = scmp.lt.s32.totalorder %s44, 1
        %s609 = scalar_select %p608, %s44, 1
        %s610 = smul.addr %s609, 2
        %s611 = smul.addr %s610, 8
        %s612 = scalar_lea.vmem %s6, %s611
        %v613 = vld [vmem:[%s607] sm:$0xf]
        %v614 = vld [vmem:[%s2] sm:$0xf]
        %616 = vset.pattern.permute.xlu0 0
        %617 = vperm.xlu0 %616, %v614
        %v618 = vpop.permute.xlu0 %617
        %v620 = vmul.f32 %v613, %v618
        %vm621 = vcmask 1043456
        %v622 = vsel %vm621, %v620, 0.0
        %v623 = vrot.slane %v622, 4
        %v624 = vadd.f32 %v622, %v623
        %v625 = vrot.slane %v624, 2
        %v626 = vadd.f32 %v624, %v625
        %v627 = vrot.slane %v626, 1
        %v628 = vadd.f32 %v626, %v627
        %s629 = sld [smem:[#allocation2]]
        %v630 = vstv %s629
        %v631 = vadd.f32 %v628, %v630
        %632 = vst [vmem:[%s581] sm:$0x1] %v631
        %s633 = sld [smem:[#allocation2 + $0x3]]
        %v634 = vstv %s633
        %v635 = vmul.f32 %v631, %v634
        %v636 = vld [vmem:[%s506] sm:$0xff]
        %v637 = vld [vmem:[%s4] sm:$0xff]
        %v638 = vld [vmem:[%s515] sm:$0xff]
        %v639 = vld [vmem:[%s515 + $0x8] sm:$0xff]
        %v640 = vld [vmem:[%s515 + $0x10] sm:$0xff]
        %v641 = vld [vmem:[%s515 + $0x18] sm:$0xff]
        %v642 = vld [vmem:[%s515 + $0x20] sm:$0xff]
        %v643 = vld [vmem:[%s515 + $0x28] sm:$0xff]
        %v644 = vld [vmem:[%s515 + $0x30] sm:$0xff]
        %v645 = vld [vmem:[%s515 + $0x38] sm:$0xff]
        %vm646 = vcmask 523264
        %v648 = vsel %vm646, %v636, 0
        %650 = vmatprep.subr.mxu0 0.0
        %v651 = vand.u32 %v638, 4294901760
        %652 = vmatpush1.msra.mxu0 %v651
        %653 = vmatprep.subr.mxu0 0.0
        %v654 = vand.u32 %v639, 4294901760
        %655 = vmatpush1.msra.mxu0 %v654
        %656 = vmatprep.subr.mxu0 0.0
        %v657 = vand.u32 %v640, 4294901760
        %658 = vmatpush1.msra.mxu0 %v657
        %659 = vmatprep.subr.mxu0 0.0
        %v660 = vand.u32 %v641, 4294901760
        %661 = vmatpush1.msra.mxu0 %v660
        %662 = vmatprep.subr.mxu0 0.0
        %v663 = vand.u32 %v642, 4294901760
        %664 = vmatpush1.msra.mxu0 %v663
        %665 = vmatprep.subr.mxu0 0.0
        %v666 = vand.u32 %v643, 4294901760
        %667 = vmatpush1.msra.mxu0 %v666
        %668 = vmatprep.subr.mxu0 0.0
        %v669 = vand.u32 %v644, 4294901760
        %670 = vmatpush1.msra.mxu0 %v669
        %671 = vmatprep.subr.mxu0 0.0
        %v672 = vand.u32 %v645, 4294901760
        %673 = vmatpush1.msra.mxu0 %v672
        %674 = vmatprep.subr.mxu0 0.0
        %675 = vmatpush1.msra.mxu0 0.0
        %676 = vmatprep.subr.mxu0 0.0
        %677 = vmatpush1.msra.mxu0 0.0
        %678 = vmatprep.subr.mxu0 0.0
        %679 = vmatpush1.msra.mxu0 0.0
        %680 = vmatprep.subr.mxu0 0.0
        %681 = vmatpush1.msra.mxu0 0.0
        %682 = vmatprep.subr.mxu0 0.0
        %683 = vmatpush1.msra.mxu0 0.0
        %684 = vmatprep.subr.mxu0 0.0
        %685 = vmatpush1.msra.mxu0 0.0
        %686 = vmatprep.subr.mxu0 0.0
        %687 = vmatpush1.msra.mxu0 0.0
        %688 = vmatprep.subr.mxu0 0.0
        %689 = vmatpush1.msra.mxu0 0.0
        %690 = vmatprep.subr.mxu0 0.0
        %691 = vmatpush1.msra.mxu0 0.0
        %692 = vmatprep.subr.mxu0 0.0
        %693 = vmatpush1.msra.mxu0 0.0
        %694 = vmatprep.subr.mxu0 0.0
        %695 = vmatpush1.msra.mxu0 0.0
        %696 = vmatprep.subr.mxu0 0.0
        %697 = vmatpush1.msra.mxu0 0.0
        %698 = vmatprep.subr.mxu0 0.0
        %699 = vmatpush1.msra.mxu0 0.0
        %700 = vmatprep.subr.mxu0 0.0
        %701 = vmatpush1.msra.mxu0 0.0
        %702 = vmatprep.subr.mxu0 0.0
        %703 = vmatpush1.msra.mxu0 0.0
        %704 = vmatprep.subr.mxu0 0.0
        %705 = vmatpush1.msra.mxu0 0.0
        %706 = vmatprep.subr.mxu0 0.0
        %707 = vmatpush1.msra.mxu0 0.0
        %708 = vmatprep.subr.mxu0 0.0
        %709 = vmatpush1.msra.mxu0 0.0
        %710 = vmatprep.subr.mxu0 0.0
        %711 = vmatpush1.msra.mxu0 0.0
        %712 = vmatprep.subr.mxu0 0.0
        %713 = vmatpush1.msra.mxu0 0.0
        %714 = vmatprep.subr.mxu0 0.0
        %715 = vmatpush1.msra.mxu0 0.0
        %716 = vmatprep.subr.mxu0 0.0
        %717 = vmatpush1.msra.mxu0 0.0
        %718 = vmatprep.subr.mxu0 0.0
        %719 = vmatpush1.msra.mxu0 0.0
        %720 = vmatprep.subr.mxu0 0.0
        %721 = vmatpush1.msra.mxu0 0.0
        %722 = vmatprep.mubr.f32.mxu0 0.0
        %v723 = vand.u32 %v648, 4294901760
        %v724 = vsub.f32 %v648, %v723
        %v725 = vand.u32 %v724, 4294901760
        %v726 = vsub.f32 %v724, %v725
        %v727 = vand.u32 %v726, 4294901760
        %728 = vmatmul.mubr.f32.gmra.mrb[0].mxu0 %v727
        %v729 = vpop.f32.mrb[0].mxu0
        %v730 = vadd.f32 0.0, %v729
        %v731 = vpop.f32.mrb[0].mxu0
        %732 = vdwg.mxu0
        %733 = vmatprep.subr.mxu0 0.0
        %v734 = vand.u32 %v638, 4294901760
        %v735 = vsub.f32 %v638, %v734
        %v736 = vand.u32 %v735, 4294901760
        %v737 = vsub.f32 %v735, %v736
        %v738 = vand.u32 %v737, 4294901760
        %739 = vmatpush1.msra.mxu0 %v738
        %740 = vmatprep.subr.mxu0 0.0
        %v741 = vand.u32 %v639, 4294901760
        %v742 = vsub.f32 %v639, %v741
        %v743 = vand.u32 %v742, 4294901760
        %v744 = vsub.f32 %v742, %v743
        %v745 = vand.u32 %v744, 4294901760
        %746 = vmatpush1.msra.mxu0 %v745
        %747 = vmatprep.subr.mxu0 0.0
        %v748 = vand.u32 %v640, 4294901760
        %v749 = vsub.f32 %v640, %v748
        %v750 = vand.u32 %v749, 4294901760
        %v751 = vsub.f32 %v749, %v750
        %v752 = vand.u32 %v751, 4294901760
        %753 = vmatpush1.msra.mxu0 %v752
        %754 = vmatprep.subr.mxu0 0.0
        %v755 = vand.u32 %v641, 4294901760
        %v756 = vsub.f32 %v641, %v755
        %v757 = vand.u32 %v756, 4294901760
        %v758 = vsub.f32 %v756, %v757
        %v759 = vand.u32 %v758, 4294901760
        %760 = vmatpush1.msra.mxu0 %v759
        %761 = vmatprep.subr.mxu0 0.0
        %v762 = vand.u32 %v642, 4294901760
        %v763 = vsub.f32 %v642, %v762
        %v764 = vand.u32 %v763, 4294901760
        %v765 = vsub.f32 %v763, %v764
        %v766 = vand.u32 %v765, 4294901760
        %767 = vmatpush1.msra.mxu0 %v766
        %768 = vmatprep.subr.mxu0 0.0
        %v769 = vand.u32 %v643, 4294901760
        %v770 = vsub.f32 %v643, %v769
        %v771 = vand.u32 %v770, 4294901760
        %v772 = vsub.f32 %v770, %v771
        %v773 = vand.u32 %v772, 4294901760
        %774 = vmatpush1.msra.mxu0 %v773
        %775 = vmatprep.subr.mxu0 0.0
        %v776 = vand.u32 %v644, 4294901760
        %v777 = vsub.f32 %v644, %v776
        %v778 = vand.u32 %v777, 4294901760
        %v779 = vsub.f32 %v777, %v778
        %v780 = vand.u32 %v779, 4294901760
        %781 = vmatpush1.msra.mxu0 %v780
        %782 = vmatprep.subr.mxu0 0.0
        %v783 = vand.u32 %v645, 4294901760
        %v784 = vsub.f32 %v645, %v783
        %v785 = vand.u32 %v784, 4294901760
        %v786 = vsub.f32 %v784, %v785
        %v787 = vand.u32 %v786, 4294901760
        %788 = vmatpush1.msra.mxu0 %v787
        %789 = vmatprep.subr.mxu0 0.0
        %790 = vmatpush1.msra.mxu0 0.0
        %791 = vmatprep.subr.mxu0 0.0
        %792 = vmatpush1.msra.mxu0 0.0
        %793 = vmatprep.subr.mxu0 0.0
        %794 = vmatpush1.msra.mxu0 0.0
        %795 = vmatprep.subr.mxu0 0.0
        %796 = vmatpush1.msra.mxu0 0.0
        %797 = vmatprep.subr.mxu0 0.0
        %798 = vmatpush1.msra.mxu0 0.0
        %799 = vmatprep.subr.mxu0 0.0
        %800 = vmatpush1.msra.mxu0 0.0
        %801 = vmatprep.subr.mxu0 0.0
        %802 = vmatpush1.msra.mxu0 0.0
        %803 = vmatprep.subr.mxu0 0.0
        %804 = vmatpush1.msra.mxu0 0.0
        %805 = vmatprep.subr.mxu0 0.0
        %806 = vmatpush1.msra.mxu0 0.0
        %807 = vmatprep.subr.mxu0 0.0
        %808 = vmatpush1.msra.mxu0 0.0
        %809 = vmatprep.subr.mxu0 0.0
        %810 = vmatpush1.msra.mxu0 0.0
        %811 = vmatprep.subr.mxu0 0.0
        %812 = vmatpush1.msra.mxu0 0.0
        %813 = vmatprep.subr.mxu0 0.0
        %814 = vmatpush1.msra.mxu0 0.0
        %815 = vmatprep.subr.mxu0 0.0
        %816 = vmatpush1.msra.mxu0 0.0
        %817 = vmatprep.subr.mxu0 0.0
        %818 = vmatpush1.msra.mxu0 0.0
        %819 = vmatprep.subr.mxu0 0.0
        %820 = vmatpush1.msra.mxu0 0.0
        %821 = vmatprep.subr.mxu0 0.0
        %822 = vmatpush1.msra.mxu0 0.0
        %823 = vmatprep.subr.mxu0 0.0
        %824 = vmatpush1.msra.mxu0 0.0
        %825 = vmatprep.subr.mxu0 0.0
        %826 = vmatpush1.msra.mxu0 0.0
        %827 = vmatprep.subr.mxu0 0.0
        %828 = vmatpush1.msra.mxu0 0.0
        %829 = vmatprep.subr.mxu0 0.0
        %830 = vmatpush1.msra.mxu0 0.0
        %831 = vmatprep.subr.mxu0 0.0
        %832 = vmatpush1.msra.mxu0 0.0
        %833 = vmatprep.subr.mxu0 0.0
        %834 = vmatpush1.msra.mxu0 0.0
        %835 = vmatprep.subr.mxu0 0.0
        %836 = vmatpush1.msra.mxu0 0.0
        %837 = vmatprep.mubr.f32.mxu0 0.0
        %v838 = vand.u32 %v648, 4294901760
        %839 = vmatmul.mubr.f32.gmra.mrb[0].mxu0 %v838
        %v840 = vpop.f32.mrb[0].mxu0
        %v841 = vadd.f32 %v730, %v840
        %v842 = vpop.f32.mrb[0].mxu0
        %843 = vdwg.mxu0
        %844 = vmatprep.subr.mxu0 0.0
        %v845 = vand.u32 %v638, 4294901760
        %v846 = vsub.f32 %v638, %v845
        %847 = vmatpush1.msra.mxu0 %v846
        %848 = vmatprep.subr.mxu0 0.0
        %v849 = vand.u32 %v639, 4294901760
        %v850 = vsub.f32 %v639, %v849
        %851 = vmatpush1.msra.mxu0 %v850
        %852 = vmatprep.subr.mxu0 0.0
        %v853 = vand.u32 %v640, 4294901760
        %v854 = vsub.f32 %v640, %v853
        %855 = vmatpush1.msra.mxu0 %v854
        %856 = vmatprep.subr.mxu0 0.0
        %v857 = vand.u32 %v641, 4294901760
        %v858 = vsub.f32 %v641, %v857
        %859 = vmatpush1.msra.mxu0 %v858
        %860 = vmatprep.subr.mxu0 0.0
        %v861 = vand.u32 %v642, 4294901760
        %v862 = vsub.f32 %v642, %v861
        %863 = vmatpush1.msra.mxu0 %v862
        %864 = vmatprep.subr.mxu0 0.0
        %v865 = vand.u32 %v643, 4294901760
        %v866 = vsub.f32 %v643, %v865
        %867 = vmatpush1.msra.mxu0 %v866
        %868 = vmatprep.subr.mxu0 0.0
        %v869 = vand.u32 %v644, 4294901760
        %v870 = vsub.f32 %v644, %v869
        %871 = vmatpush1.msra.mxu0 %v870
        %872 = vmatprep.subr.mxu0 0.0
        %v873 = vand.u32 %v645, 4294901760
        %v874 = vsub.f32 %v645, %v873
        %875 = vmatpush1.msra.mxu0 %v874
        %876 = vmatprep.subr.mxu0 0.0
        %877 = vmatpush1.msra.mxu0 0.0
        %878 = vmatprep.subr.mxu0 0.0
        %879 = vmatpush1.msra.mxu0 0.0
        %880 = vmatprep.subr.mxu0 0.0
        %881 = vmatpush1.msra.mxu0 0.0
        %882 = vmatprep.subr.mxu0 0.0
        %883 = vmatpush1.msra.mxu0 0.0
        %884 = vmatprep.subr.mxu0 0.0
        %885 = vmatpush1.msra.mxu0 0.0
        %886 = vmatprep.subr.mxu0 0.0
        %887 = vmatpush1.msra.mxu0 0.0
        %888 = vmatprep.subr.mxu0 0.0
        %889 = vmatpush1.msra.mxu0 0.0
        %890 = vmatprep.subr.mxu0 0.0
        %891 = vmatpush1.msra.mxu0 0.0
        %892 = vmatprep.subr.mxu0 0.0
        %893 = vmatpush1.msra.mxu0 0.0
        %894 = vmatprep.subr.mxu0 0.0
        %895 = vmatpush1.msra.mxu0 0.0
        %896 = vmatprep.subr.mxu0 0.0
        %897 = vmatpush1.msra.mxu0 0.0
        %898 = vmatprep.subr.mxu0 0.0
        %899 = vmatpush1.msra.mxu0 0.0
        %900 = vmatprep.subr.mxu0 0.0
        %901 = vmatpush1.msra.mxu0 0.0
        %902 = vmatprep.subr.mxu0 0.0
        %903 = vmatpush1.msra.mxu0 0.0
        %904 = vmatprep.subr.mxu0 0.0
        %905 = vmatpush1.msra.mxu0 0.0
        %906 = vmatprep.subr.mxu0 0.0
        %907 = vmatpush1.msra.mxu0 0.0
        %908 = vmatprep.subr.mxu0 0.0
        %909 = vmatpush1.msra.mxu0 0.0
        %910 = vmatprep.subr.mxu0 0.0
        %911 = vmatpush1.msra.mxu0 0.0
        %912 = vmatprep.subr.mxu0 0.0
        %913 = vmatpush1.msra.mxu0 0.0
        %914 = vmatprep.subr.mxu0 0.0
        %915 = vmatpush1.msra.mxu0 0.0
        %916 = vmatprep.subr.mxu0 0.0
        %917 = vmatpush1.msra.mxu0 0.0
        %918 = vmatprep.subr.mxu0 0.0
        %919 = vmatpush1.msra.mxu0 0.0
        %920 = vmatprep.subr.mxu0 0.0
        %921 = vmatpush1.msra.mxu0 0.0
        %922 = vmatprep.subr.mxu0 0.0
        %923 = vmatpush1.msra.mxu0 0.0
        %924 = vmatprep.mubr.f32.mxu0 0.0
        %v925 = vand.u32 %v648, 4294901760
        %v926 = vsub.f32 %v648, %v925
        %927 = vmatmul.mubr.f32.gmra.mrb[0].mxu0 %v926
        %v928 = vpop.f32.mrb[0].mxu0
        %v929 = vadd.f32 %v841, %v928
        %v930 = vpop.f32.mrb[0].mxu0
        %931 = vdwg.mxu0
        %932 = vmatprep.subr.mxu0 0.0
        %v933 = vand.u32 %v638, 4294901760
        %934 = vmatpush1.msra.mxu0 %v933
        %935 = vmatprep.subr.mxu0 0.0
        %v936 = vand.u32 %v639, 4294901760
        %937 = vmatpush1.msra.mxu0 %v936
        %938 = vmatprep.subr.mxu0 0.0
        %v939 = vand.u32 %v640, 4294901760
        %940 = vmatpush1.msra.mxu0 %v939
        %941 = vmatprep.subr.mxu0 0.0
        %v942 = vand.u32 %v641, 4294901760
        %943 = vmatpush1.msra.mxu0 %v942
        %944 = vmatprep.subr.mxu0 0.0
        %v945 = vand.u32 %v642, 4294901760
        %946 = vmatpush1.msra.mxu0 %v945
        %947 = vmatprep.subr.mxu0 0.0
        %v948 = vand.u32 %v643, 4294901760
        %949 = vmatpush1.msra.mxu0 %v948
        %950 = vmatprep.subr.mxu0 0.0
        %v951 = vand.u32 %v644, 4294901760
        %952 = vmatpush1.msra.mxu0 %v951
        %953 = vmatprep.subr.mxu0 0.0
        %v954 = vand.u32 %v645, 4294901760
        %955 = vmatpush1.msra.mxu0 %v954
        %956 = vmatprep.subr.mxu0 0.0
        %957 = vmatpush1.msra.mxu0 0.0
        %958 = vmatprep.subr.mxu0 0.0
        %959 = vmatpush1.msra.mxu0 0.0
        %960 = vmatprep.subr.mxu0 0.0
        %961 = vmatpush1.msra.mxu0 0.0
        %962 = vmatprep.subr.mxu0 0.0
        %963 = vmatpush1.msra.mxu0 0.0
        %964 = vmatprep.subr.mxu0 0.0
        %965 = vmatpush1.msra.mxu0 0.0
        %966 = vmatprep.subr.mxu0 0.0
        %967 = vmatpush1.msra.mxu0 0.0
        %968 = vmatprep.subr.mxu0 0.0
        %969 = vmatpush1.msra.mxu0 0.0
        %970 = vmatprep.subr.mxu0 0.0
        %971 = vmatpush1.msra.mxu0 0.0
        %972 = vmatprep.subr.mxu0 0.0
        %973 = vmatpush1.msra.mxu0 0.0
        %974 = vmatprep.subr.mxu0 0.0
        %975 = vmatpush1.msra.mxu0 0.0
        %976 = vmatprep.subr.mxu0 0.0
        %977 = vmatpush1.msra.mxu0 0.0
        %978 = vmatprep.subr.mxu0 0.0
        %979 = vmatpush1.msra.mxu0 0.0
        %980 = vmatprep.subr.mxu0 0.0
        %981 = vmatpush1.msra.mxu0 0.0
        %982 = vmatprep.subr.mxu0 0.0
        %983 = vmatpush1.msra.mxu0 0.0
        %984 = vmatprep.subr.mxu0 0.0
        %985 = vmatpush1.msra.mxu0 0.0
        %986 = vmatprep.subr.mxu0 0.0
        %987 = vmatpush1.msra.mxu0 0.0
        %988 = vmatprep.subr.mxu0 0.0
        %989 = vmatpush1.msra.mxu0 0.0
        %990 = vmatprep.subr.mxu0 0.0
        %991 = vmatpush1.msra.mxu0 0.0
        %992 = vmatprep.subr.mxu0 0.0
        %993 = vmatpush1.msra.mxu0 0.0
        %994 = vmatprep.subr.mxu0 0.0
        %995 = vmatpush1.msra.mxu0 0.0
        %996 = vmatprep.subr.mxu0 0.0
        %997 = vmatpush1.msra.mxu0 0.0
        %998 = vmatprep.subr.mxu0 0.0
        %999 = vmatpush1.msra.mxu0 0.0
        %1000 = vmatprep.subr.mxu0 0.0
        %1001 = vmatpush1.msra.mxu0 0.0
        %1002 = vmatprep.subr.mxu0 0.0
        %1003 = vmatpush1.msra.mxu0 0.0
        %1004 = vmatprep.mubr.f32.mxu0 0.0
        %v1005 = vand.u32 %v648, 4294901760
        %v1006 = vsub.f32 %v648, %v1005
        %v1007 = vand.u32 %v1006, 4294901760
        %1008 = vmatmul.mubr.f32.gmra.mrb[0].mxu0 %v1007
        %v1009 = vpop.f32.mrb[0].mxu0
        %v1010 = vadd.f32 %v929, %v1009
        %v1011 = vpop.f32.mrb[0].mxu0
        %1012 = vdwg.mxu0
        %1013 = vmatprep.subr.mxu0 0.0
        %v1014 = vand.u32 %v638, 4294901760
        %v1015 = vsub.f32 %v638, %v1014
        %v1016 = vand.u32 %v1015, 4294901760
        %1017 = vmatpush1.msra.mxu0 %v1016
        %1018 = vmatprep.subr.mxu0 0.0
        %v1019 = vand.u32 %v639, 4294901760
        %v1020 = vsub.f32 %v639, %v1019
        %v1021 = vand.u32 %v1020, 4294901760
        %1022 = vmatpush1.msra.mxu0 %v1021
        %1023 = vmatprep.subr.mxu0 0.0
        %v1024 = vand.u32 %v640, 4294901760
        %v1025 = vsub.f32 %v640, %v1024
        %v1026 = vand.u32 %v1025, 4294901760
        %1027 = vmatpush1.msra.mxu0 %v1026
        %1028 = vmatprep.subr.mxu0 0.0
        %v1029 = vand.u32 %v641, 4294901760
        %v1030 = vsub.f32 %v641, %v1029
        %v1031 = vand.u32 %v1030, 4294901760
        %1032 = vmatpush1.msra.mxu0 %v1031
        %1033 = vmatprep.subr.mxu0 0.0
        %v1034 = vand.u32 %v642, 4294901760
        %v1035 = vsub.f32 %v642, %v1034
        %v1036 = vand.u32 %v1035, 4294901760
        %1037 = vmatpush1.msra.mxu0 %v1036
        %1038 = vmatprep.subr.mxu0 0.0
        %v1039 = vand.u32 %v643, 4294901760
        %v1040 = vsub.f32 %v643, %v1039
        %v1041 = vand.u32 %v1040, 4294901760
        %1042 = vmatpush1.msra.mxu0 %v1041
        %1043 = vmatprep.subr.mxu0 0.0
        %v1044 = vand.u32 %v644, 4294901760
        %v1045 = vsub.f32 %v644, %v1044
        %v1046 = vand.u32 %v1045, 4294901760
        %1047 = vmatpush1.msra.mxu0 %v1046
        %1048 = vmatprep.subr.mxu0 0.0
        %v1049 = vand.u32 %v645, 4294901760
        %v1050 = vsub.f32 %v645, %v1049
        %v1051 = vand.u32 %v1050, 4294901760
        %1052 = vmatpush1.msra.mxu0 %v1051
        %1053 = vmatprep.subr.mxu0 0.0
        %1054 = vmatpush1.msra.mxu0 0.0
        %1055 = vmatprep.subr.mxu0 0.0
        %1056 = vmatpush1.msra.mxu0 0.0
        %1057 = vmatprep.subr.mxu0 0.0
        %1058 = vmatpush1.msra.mxu0 0.0
        %1059 = vmatprep.subr.mxu0 0.0
        %1060 = vmatpush1.msra.mxu0 0.0
        %1061 = vmatprep.subr.mxu0 0.0
        %1062 = vmatpush1.msra.mxu0 0.0
        %1063 = vmatprep.subr.mxu0 0.0
        %1064 = vmatpush1.msra.mxu0 0.0
        %1065 = vmatprep.subr.mxu0 0.0
        %1066 = vmatpush1.msra.mxu0 0.0
        %1067 = vmatprep.subr.mxu0 0.0
        %1068 = vmatpush1.msra.mxu0 0.0
        %1069 = vmatprep.subr.mxu0 0.0
        %1070 = vmatpush1.msra.mxu0 0.0
        %1071 = vmatprep.subr.mxu0 0.0
        %1072 = vmatpush1.msra.mxu0 0.0
        %1073 = vmatprep.subr.mxu0 0.0
        %1074 = vmatpush1.msra.mxu0 0.0
        %1075 = vmatprep.subr.mxu0 0.0
        %1076 = vmatpush1.msra.mxu0 0.0
        %1077 = vmatprep.subr.mxu0 0.0
        %1078 = vmatpush1.msra.mxu0 0.0
        %1079 = vmatprep.subr.mxu0 0.0
        %1080 = vmatpush1.msra.mxu0 0.0
        %1081 = vmatprep.subr.mxu0 0.0
        %1082 = vmatpush1.msra.mxu0 0.0
        %1083 = vmatprep.subr.mxu0 0.0
        %1084 = vmatpush1.msra.mxu0 0.0
        %1085 = vmatprep.subr.mxu0 0.0
        %1086 = vmatpush1.msra.mxu0 0.0
        %1087 = vmatprep.subr.mxu0 0.0
        %1088 = vmatpush1.msra.mxu0 0.0
        %1089 = vmatprep.subr.mxu0 0.0
        %1090 = vmatpush1.msra.mxu0 0.0
        %1091 = vmatprep.subr.mxu0 0.0
        %1092 = vmatpush1.msra.mxu0 0.0
        %1093 = vmatprep.subr.mxu0 0.0
        %1094 = vmatpush1.msra.mxu0 0.0
        %1095 = vmatprep.subr.mxu0 0.0
        %1096 = vmatpush1.msra.mxu0 0.0
        %1097 = vmatprep.subr.mxu0 0.0
        %1098 = vmatpush1.msra.mxu0 0.0
        %1099 = vmatprep.subr.mxu0 0.0
        %1100 = vmatpush1.msra.mxu0 0.0
        %1101 = vmatprep.mubr.f32.mxu0 0.0
        %v1102 = vand.u32 %v648, 4294901760
        %1103 = vmatmul.mubr.f32.gmra.mrb[0].mxu0 %v1102
        %v1104 = vpop.f32.mrb[0].mxu0
        %v1105 = vadd.f32 %v1010, %v1104
        %v1106 = vpop.f32.mrb[0].mxu0
        %1107 = vdwg.mxu0
        %1108 = vmatprep.subr.mxu0 0.0
        %v1109 = vand.u32 %v638, 4294901760
        %1110 = vmatpush1.msra.mxu0 %v1109
        %1111 = vmatprep.subr.mxu0 0.0
        %v1112 = vand.u32 %v639, 4294901760
        %1113 = vmatpush1.msra.mxu0 %v1112
        %1114 = vmatprep.subr.mxu0 0.0
        %v1115 = vand.u32 %v640, 4294901760
        %1116 = vmatpush1.msra.mxu0 %v1115
        %1117 = vmatprep.subr.mxu0 0.0
        %v1118 = vand.u32 %v641, 4294901760
        %1119 = vmatpush1.msra.mxu0 %v1118
        %1120 = vmatprep.subr.mxu0 0.0
        %v1121 = vand.u32 %v642, 4294901760
        %1122 = vmatpush1.msra.mxu0 %v1121
        %1123 = vmatprep.subr.mxu0 0.0
        %v1124 = vand.u32 %v643, 4294901760
        %1125 = vmatpush1.msra.mxu0 %v1124
        %1126 = vmatprep.subr.mxu0 0.0
        %v1127 = vand.u32 %v644, 4294901760
        %1128 = vmatpush1.msra.mxu0 %v1127
        %1129 = vmatprep.subr.mxu0 0.0
        %v1130 = vand.u32 %v645, 4294901760
        %1131 = vmatpush1.msra.mxu0 %v1130
        %1132 = vmatprep.subr.mxu0 0.0
        %1133 = vmatpush1.msra.mxu0 0.0
        %1134 = vmatprep.subr.mxu0 0.0
        %1135 = vmatpush1.msra.mxu0 0.0
        %1136 = vmatprep.subr.mxu0 0.0
        %1137 = vmatpush1.msra.mxu0 0.0
        %1138 = vmatprep.subr.mxu0 0.0
        %1139 = vmatpush1.msra.mxu0 0.0
        %1140 = vmatprep.subr.mxu0 0.0
        %1141 = vmatpush1.msra.mxu0 0.0
        %1142 = vmatprep.subr.mxu0 0.0
        %1143 = vmatpush1.msra.mxu0 0.0
        %1144 = vmatprep.subr.mxu0 0.0
        %1145 = vmatpush1.msra.mxu0 0.0
        %1146 = vmatprep.subr.mxu0 0.0
        %1147 = vmatpush1.msra.mxu0 0.0
        %1148 = vmatprep.subr.mxu0 0.0
        %1149 = vmatpush1.msra.mxu0 0.0
        %1150 = vmatprep.subr.mxu0 0.0
        %1151 = vmatpush1.msra.mxu0 0.0
        %1152 = vmatprep.subr.mxu0 0.0
        %1153 = vmatpush1.msra.mxu0 0.0
        %1154 = vmatprep.subr.mxu0 0.0
        %1155 = vmatpush1.msra.mxu0 0.0
        %1156 = vmatprep.subr.mxu0 0.0
        %1157 = vmatpush1.msra.mxu0 0.0
        %1158 = vmatprep.subr.mxu0 0.0
        %1159 = vmatpush1.msra.mxu0 0.0
        %1160 = vmatprep.subr.mxu0 0.0
        %1161 = vmatpush1.msra.mxu0 0.0
        %1162 = vmatprep.subr.mxu0 0.0
        %1163 = vmatpush1.msra.mxu0 0.0
        %1164 = vmatprep.subr.mxu0 0.0
        %1165 = vmatpush1.msra.mxu0 0.0
        %1166 = vmatprep.subr.mxu0 0.0
        %1167 = vmatpush1.msra.mxu0 0.0
        %1168 = vmatprep.subr.mxu0 0.0
        %1169 = vmatpush1.msra.mxu0 0.0
        %1170 = vmatprep.subr.mxu0 0.0
        %1171 = vmatpush1.msra.mxu0 0.0
        %1172 = vmatprep.subr.mxu0 0.0
        %1173 = vmatpush1.msra.mxu0 0.0
        %1174 = vmatprep.subr.mxu0 0.0
        %1175 = vmatpush1.msra.mxu0 0.0
        %1176 = vmatprep.subr.mxu0 0.0
        %1177 = vmatpush1.msra.mxu0 0.0
        %1178 = vmatprep.subr.mxu0 0.0
        %1179 = vmatpush1.msra.mxu0 0.0
        %1180 = vmatprep.mubr.f32.mxu0 0.0
        %v1181 = vand.u32 %v648, 4294901760
        %1182 = vmatmul.mubr.f32.gmra.mrb[0].mxu0 %v1181
        %v1183 = vpop.f32.mrb[0].mxu0
        %v1184 = vadd.f32 %v1105, %v1183
        %v1185 = vpop.f32.mrb[0].mxu0
        %1186 = vdwg.mxu0
        %1188 = vset.pattern.permute.xlu0 0
        %1189 = vperm.xlu0 %1188, %v637
        %v1190 = vpop.permute.xlu0 %1189
        %v1192 = vmul.f32 %v1184, %v1190
        %v1193 = vrot.slane %v1192, 4
        %v1194 = vadd.f32 %v1192, %v1193
        %v1195 = vrot.slane %v1194, 2
        %v1196 = vadd.f32 %v1194, %v1195
        %v1197 = vrot.slane %v1196, 1
        %v1198 = vadd.f32 %v1196, %v1197
        %s1199 = sld [smem:[#allocation2 + $0x1]]
        %v1200 = vstv %s1199
        %v1201 = vadd.f32 %v1198, %v1200
        %1202 = vst [vmem:[%s587] sm:$0x1] %v1201
        %s1203 = sld [smem:[#allocation2 + $0x4]]
        %v1204 = vstv %s1203
        %v1205 = vmul.f32 %v1201, %v1204
        %v1206 = vadd.f32 %v635, %v1205
        %v1207 = vld [vmem:[%s612] sm:$0xff]
        %v1208 = vld [vmem:[%s612 + $0x8] sm:$0xff]
        %v1209 = vld [vmem:[%s7] sm:$0xff]
        %v1210 = vld [vmem:[%s7 + $0x8] sm:$0xff]
        %v1211 = vld [vmem:[%s524] sm:$0xff]
        %v1212 = vld [vmem:[%s524 + $0x8] sm:$0xff]
        %vm1213 = vcmask 130048
        %v1215 = vsel %vm1213, %v1207, 0
        %v1218 = vsel %vm1213, %v1208, 0
        %1220 = vmatprep.subr.mxu0 0.0
        %v1221 = vand.u32 %v1211, 4294901760
        %1222 = vmatpush1.msra.mxu0 %v1221
        %1223 = vmatprep.subr.mxu0 0.0
        %v1224 = vand.u32 %v1212, 4294901760
        %1225 = vmatpush1.msra.mxu0 %v1224
        %1226 = vmatprep.subr.mxu0 0.0
        %1227 = vmatpush1.msra.mxu0 0.0
        %1228 = vmatprep.subr.mxu0 0.0
        %1229 = vmatpush1.msra.mxu0 0.0
        %1230 = vmatprep.subr.mxu0 0.0
        %1231 = vmatpush1.msra.mxu0 0.0
        %1232 = vmatprep.subr.mxu0 0.0
        %1233 = vmatpush1.msra.mxu0 0.0
        %1234 = vmatprep.subr.mxu0 0.0
        %1235 = vmatpush1.msra.mxu0 0.0
        %1236 = vmatprep.subr.mxu0 0.0
        %1237 = vmatpush1.msra.mxu0 0.0
        %1238 = vmatprep.subr.mxu0 0.0
        %1239 = vmatpush1.msra.mxu0 0.0
        %1240 = vmatprep.subr.mxu0 0.0
        %1241 = vmatpush1.msra.mxu0 0.0
        %1242 = vmatprep.subr.mxu0 0.0
        %1243 = vmatpush1.msra.mxu0 0.0
        %1244 = vmatprep.subr.mxu0 0.0
        %1245 = vmatpush1.msra.mxu0 0.0
        %1246 = vmatprep.subr.mxu0 0.0
        %1247 = vmatpush1.msra.mxu0 0.0
        %1248 = vmatprep.subr.mxu0 0.0
        %1249 = vmatpush1.msra.mxu0 0.0
        %1250 = vmatprep.subr.mxu0 0.0
        %1251 = vmatpush1.msra.mxu0 0.0
        %1252 = vmatprep.subr.mxu0 0.0
        %1253 = vmatpush1.msra.mxu0 0.0
        %1254 = vmatprep.subr.mxu0 0.0
        %1255 = vmatpush1.msra.mxu0 0.0
        %1256 = vmatprep.subr.mxu0 0.0
        %1257 = vmatpush1.msra.mxu0 0.0
        %1258 = vmatprep.subr.mxu0 0.0
        %1259 = vmatpush1.msra.mxu0 0.0
        %1260 = vmatprep.subr.mxu0 0.0
        %1261 = vmatpush1.msra.mxu0 0.0
        %1262 = vmatprep.subr.mxu0 0.0
        %1263 = vmatpush1.msra.mxu0 0.0
        %1264 = vmatprep.subr.mxu0 0.0
        %1265 = vmatpush1.msra.mxu0 0.0
        %1266 = vmatprep.subr.mxu0 0.0
        %1267 = vmatpush1.msra.mxu0 0.0
        %1268 = vmatprep.subr.mxu0 0.0
        %1269 = vmatpush1.msra.mxu0 0.0
        %1270 = vmatprep.subr.mxu0 0.0
        %1271 = vmatpush1.msra.mxu0 0.0
        %1272 = vmatprep.subr.mxu0 0.0
        %1273 = vmatpush1.msra.mxu0 0.0
        %1274 = vmatprep.subr.mxu0 0.0
        %1275 = vmatpush1.msra.mxu0 0.0
        %1276 = vmatprep.subr.mxu0 0.0
        %1277 = vmatpush1.msra.mxu0 0.0
        %1278 = vmatprep.subr.mxu0 0.0
        %1279 = vmatpush1.msra.mxu0 0.0
        %1280 = vmatprep.subr.mxu0 0.0
        %1281 = vmatpush1.msra.mxu0 0.0
        %1282 = vmatprep.subr.mxu0 0.0
        %1283 = vmatpush1.msra.mxu0 0.0
        %1284 = vmatprep.subr.mxu0 0.0
        %1285 = vmatpush1.msra.mxu0 0.0
        %1286 = vmatprep.mubr.f32.mxu0 0.0
        %v1287 = vand.u32 %v1215, 4294901760
        %v1288 = vsub.f32 %v1215, %v1287
        %v1289 = vand.u32 %v1288, 4294901760
        %v1290 = vsub.f32 %v1288, %v1289
        %v1291 = vand.u32 %v1290, 4294901760
        %1292 = vmatmul.mubr.f32.gmra.mrb[0].mxu0 %v1291
        %v1293 = vpop.f32.mrb[0].mxu0
        %v1294 = vadd.f32 0.0, %v1293
        %v1295 = vpop.f32.mrb[0].mxu0
        %1296 = vmatprep.mubr.f32.mxu0 0.0
        %v1297 = vand.u32 %v1218, 4294901760
        %v1298 = vsub.f32 %v1218, %v1297
        %v1299 = vand.u32 %v1298, 4294901760
        %v1300 = vsub.f32 %v1298, %v1299
        %v1301 = vand.u32 %v1300, 4294901760
        %1302 = vmatmul.mubr.f32.gmra.mrb[0].mxu0 %v1301
        %v1303 = vpop.f32.mrb[0].mxu0
        %v1304 = vadd.f32 0.0, %v1303
        %v1305 = vpop.f32.mrb[0].mxu0
        %1306 = vdwg.mxu0
        %1307 = vmatprep.subr.mxu0 0.0
        %v1308 = vand.u32 %v1211, 4294901760
        %v1309 = vsub.f32 %v1211, %v1308
        %v1310 = vand.u32 %v1309, 4294901760
        %v1311 = vsub.f32 %v1309, %v1310
        %v1312 = vand.u32 %v1311, 4294901760
        %1313 = vmatpush1.msra.mxu0 %v1312
        %1314 = vmatprep.subr.mxu0 0.0
        %v1315 = vand.u32 %v1212, 4294901760
        %v1316 = vsub.f32 %v1212, %v1315
        %v1317 = vand.u32 %v1316, 4294901760
        %v1318 = vsub.f32 %v1316, %v1317
        %v1319 = vand.u32 %v1318, 4294901760
        %1320 = vmatpush1.msra.mxu0 %v1319
        %1321 = vmatprep.subr.mxu0 0.0
        %1322 = vmatpush1.msra.mxu0 0.0
        %1323 = vmatprep.subr.mxu0 0.0
        %1324 = vmatpush1.msra.mxu0 0.0
        %1325 = vmatprep.subr.mxu0 0.0
        %1326 = vmatpush1.msra.mxu0 0.0
        %1327 = vmatprep.subr.mxu0 0.0
        %1328 = vmatpush1.msra.mxu0 0.0
        %1329 = vmatprep.subr.mxu0 0.0
        %1330 = vmatpush1.msra.mxu0 0.0
        %1331 = vmatprep.subr.mxu0 0.0
        %1332 = vmatpush1.msra.mxu0 0.0
        %1333 = vmatprep.subr.mxu0 0.0
        %1334 = vmatpush1.msra.mxu0 0.0
        %1335 = vmatprep.subr.mxu0 0.0
        %1336 = vmatpush1.msra.mxu0 0.0
        %1337 = vmatprep.subr.mxu0 0.0
        %1338 = vmatpush1.msra.mxu0 0.0
        %1339 = vmatprep.subr.mxu0 0.0
        %1340 = vmatpush1.msra.mxu0 0.0
        %1341 = vmatprep.subr.mxu0 0.0
        %1342 = vmatpush1.msra.mxu0 0.0
        %1343 = vmatprep.subr.mxu0 0.0
        %1344 = vmatpush1.msra.mxu0 0.0
        %1345 = vmatprep.subr.mxu0 0.0
        %1346 = vmatpush1.msra.mxu0 0.0
        %1347 = vmatprep.subr.mxu0 0.0
        %1348 = vmatpush1.msra.mxu0 0.0
        %1349 = vmatprep.subr.mxu0 0.0
        %1350 = vmatpush1.msra.mxu0 0.0
        %1351 = vmatprep.subr.mxu0 0.0
        %1352 = vmatpush1.msra.mxu0 0.0
        %1353 = vmatprep.subr.mxu0 0.0
        %1354 = vmatpush1.msra.mxu0 0.0
        %1355 = vmatprep.subr.mxu0 0.0
        %1356 = vmatpush1.msra.mxu0 0.0
        %1357 = vmatprep.subr.mxu0 0.0
        %1358 = vmatpush1.msra.mxu0 0.0
        %1359 = vmatprep.subr.mxu0 0.0
        %1360 = vmatpush1.msra.mxu0 0.0
        %1361 = vmatprep.subr.mxu0 0.0
        %1362 = vmatpush1.msra.mxu0 0.0
        %1363 = vmatprep.subr.mxu0 0.0
        %1364 = vmatpush1.msra.mxu0 0.0
        %1365 = vmatprep.subr.mxu0 0.0
        %1366 = vmatpush1.msra.mxu0 0.0
        %1367 = vmatprep.subr.mxu0 0.0
        %1368 = vmatpush1.msra.mxu0 0.0
        %1369 = vmatprep.subr.mxu0 0.0
        %1370 = vmatpush1.msra.mxu0 0.0
        %1371 = vmatprep.subr.mxu0 0.0
        %1372 = vmatpush1.msra.mxu0 0.0
        %1373 = vmatprep.subr.mxu0 0.0
        %1374 = vmatpush1.msra.mxu0 0.0
        %1375 = vmatprep.subr.mxu0 0.0
        %1376 = vmatpush1.msra.mxu0 0.0
        %1377 = vmatprep.subr.mxu0 0.0
        %1378 = vmatpush1.msra.mxu0 0.0
        %1379 = vmatprep.subr.mxu0 0.0
        %1380 = vmatpush1.msra.mxu0 0.0
        %1381 = vmatprep.mubr.f32.mxu0 0.0
        %v1382 = vand.u32 %v1215, 4294901760
        %1383 = vmatmul.mubr.f32.gmra.mrb[0].mxu0 %v1382
        %v1384 = vpop.f32.mrb[0].mxu0
        %v1385 = vadd.f32 %v1294, %v1384
        %v1386 = vpop.f32.mrb[0].mxu0
        %1387 = vmatprep.mubr.f32.mxu0 0.0
        %v1388 = vand.u32 %v1218, 4294901760
        %1389 = vmatmul.mubr.f32.gmra.mrb[0].mxu0 %v1388
        %v1390 = vpop.f32.mrb[0].mxu0
        %v1391 = vadd.f32 %v1304, %v1390
        %v1392 = vpop.f32.mrb[0].mxu0
        %1393 = vdwg.mxu0
        %1394 = vmatprep.subr.mxu0 0.0
        %v1395 = vand.u32 %v1211, 4294901760
        %v1396 = vsub.f32 %v1211, %v1395
        %1397 = vmatpush1.msra.mxu0 %v1396
        %1398 = vmatprep.subr.mxu0 0.0
        %v1399 = vand.u32 %v1212, 4294901760
        %v1400 = vsub.f32 %v1212, %v1399
        %1401 = vmatpush1.msra.mxu0 %v1400
        %1402 = vmatprep.subr.mxu0 0.0
        %1403 = vmatpush1.msra.mxu0 0.0
        %1404 = vmatprep.subr.mxu0 0.0
        %1405 = vmatpush1.msra.mxu0 0.0
        %1406 = vmatprep.subr.mxu0 0.0
        %1407 = vmatpush1.msra.mxu0 0.0
        %1408 = vmatprep.subr.mxu0 0.0
        %1409 = vmatpush1.msra.mxu0 0.0
        %1410 = vmatprep.subr.mxu0 0.0
        %1411 = vmatpush1.msra.mxu0 0.0
        %1412 = vmatprep.subr.mxu0 0.0
        %1413 = vmatpush1.msra.mxu0 0.0
        %1414 = vmatprep.subr.mxu0 0.0
        %1415 = vmatpush1.msra.mxu0 0.0
        %1416 = vmatprep.subr.mxu0 0.0
        %1417 = vmatpush1.msra.mxu0 0.0
        %1418 = vmatprep.subr.mxu0 0.0
        %1419 = vmatpush1.msra.mxu0 0.0
        %1420 = vmatprep.subr.mxu0 0.0
        %1421 = vmatpush1.msra.mxu0 0.0
        %1422 = vmatprep.subr.mxu0 0.0
        %1423 = vmatpush1.msra.mxu0 0.0
        %1424 = vmatprep.subr.mxu0 0.0
        %1425 = vmatpush1.msra.mxu0 0.0
        %1426 = vmatprep.subr.mxu0 0.0
        %1427 = vmatpush1.msra.mxu0 0.0
        %1428 = vmatprep.subr.mxu0 0.0
        %1429 = vmatpush1.msra.mxu0 0.0
        %1430 = vmatprep.subr.mxu0 0.0
        %1431 = vmatpush1.msra.mxu0 0.0
        %1432 = vmatprep.subr.mxu0 0.0
        %1433 = vmatpush1.msra.mxu0 0.0
        %1434 = vmatprep.subr.mxu0 0.0
        %1435 = vmatpush1.msra.mxu0 0.0
        %1436 = vmatprep.subr.mxu0 0.0
        %1437 = vmatpush1.msra.mxu0 0.0
        %1438 = vmatprep.subr.mxu0 0.0
        %1439 = vmatpush1.msra.mxu0 0.0
        %1440 = vmatprep.subr.mxu0 0.0
        %1441 = vmatpush1.msra.mxu0 0.0
        %1442 = vmatprep.subr.mxu0 0.0
        %1443 = vmatpush1.msra.mxu0 0.0
        %1444 = vmatprep.subr.mxu0 0.0
        %1445 = vmatpush1.msra.mxu0 0.0
        %1446 = vmatprep.subr.mxu0 0.0
        %1447 = vmatpush1.msra.mxu0 0.0
        %1448 = vmatprep.subr.mxu0 0.0
        %1449 = vmatpush1.msra.mxu0 0.0
        %1450 = vmatprep.subr.mxu0 0.0
        %1451 = vmatpush1.msra.mxu0 0.0
        %1452 = vmatprep.subr.mxu0 0.0
        %1453 = vmatpush1.msra.mxu0 0.0
        %1454 = vmatprep.subr.mxu0 0.0
        %1455 = vmatpush1.msra.mxu0 0.0
        %1456 = vmatprep.subr.mxu0 0.0
        %1457 = vmatpush1.msra.mxu0 0.0
        %1458 = vmatprep.subr.mxu0 0.0
        %1459 = vmatpush1.msra.mxu0 0.0
        %1460 = vmatprep.subr.mxu0 0.0
        %1461 = vmatpush1.msra.mxu0 0.0
        %1462 = vmatprep.mubr.f32.mxu0 0.0
        %v1463 = vand.u32 %v1215, 4294901760
        %v1464 = vsub.f32 %v1215, %v1463
        %1465 = vmatmul.mubr.f32.gmra.mrb[0].mxu0 %v1464
        %v1466 = vpop.f32.mrb[0].mxu0
        %v1467 = vadd.f32 %v1385, %v1466
        %v1468 = vpop.f32.mrb[0].mxu0
        %1469 = vmatprep.mubr.f32.mxu0 0.0
        %v1470 = vand.u32 %v1218, 4294901760
        %v1471 = vsub.f32 %v1218, %v1470
        %1472 = vmatmul.mubr.f32.gmra.mrb[0].mxu0 %v1471
        %v1473 = vpop.f32.mrb[0].mxu0
        %v1474 = vadd.f32 %v1391, %v1473
        %v1475 = vpop.f32.mrb[0].mxu0
        %1476 = vdwg.mxu0
        %1477 = vmatprep.subr.mxu0 0.0
        %v1478 = vand.u32 %v1211, 4294901760
        %1479 = vmatpush1.msra.mxu0 %v1478
        %1480 = vmatprep.subr.mxu0 0.0
        %v1481 = vand.u32 %v1212, 4294901760
        %1482 = vmatpush1.msra.mxu0 %v1481
        %1483 = vmatprep.subr.mxu0 0.0
        %1484 = vmatpush1.msra.mxu0 0.0
        %1485 = vmatprep.subr.mxu0 0.0
        %1486 = vmatpush1.msra.mxu0 0.0
        %1487 = vmatprep.subr.mxu0 0.0
        %1488 = vmatpush1.msra.mxu0 0.0
        %1489 = vmatprep.subr.mxu0 0.0
        %1490 = vmatpush1.msra.mxu0 0.0
        %1491 = vmatprep.subr.mxu0 0.0
        %1492 = vmatpush1.msra.mxu0 0.0
        %1493 = vmatprep.subr.mxu0 0.0
        %1494 = vmatpush1.msra.mxu0 0.0
        %1495 = vmatprep.subr.mxu0 0.0
        %1496 = vmatpush1.msra.mxu0 0.0
        %1497 = vmatprep.subr.mxu0 0.0
        %1498 = vmatpush1.msra.mxu0 0.0
        %1499 = vmatprep.subr.mxu0 0.0
        %1500 = vmatpush1.msra.mxu0 0.0
        %1501 = vmatprep.subr.mxu0 0.0
        %1502 = vmatpush1.msra.mxu0 0.0
        %1503 = vmatprep.subr.mxu0 0.0
        %1504 = vmatpush1.msra.mxu0 0.0
        %1505 = vmatprep.subr.mxu0 0.0
        %1506 = vmatpush1.msra.mxu0 0.0
        %1507 = vmatprep.subr.mxu0 0.0
        %1508 = vmatpush1.msra.mxu0 0.0
        %1509 = vmatprep.subr.mxu0 0.0
        %1510 = vmatpush1.msra.mxu0 0.0
        %1511 = vmatprep.subr.mxu0 0.0
        %1512 = vmatpush1.msra.mxu0 0.0
        %1513 = vmatprep.subr.mxu0 0.0
        %1514 = vmatpush1.msra.mxu0 0.0
        %1515 = vmatprep.subr.mxu0 0.0
        %1516 = vmatpush1.msra.mxu0 0.0
        %1517 = vmatprep.subr.mxu0 0.0
        %1518 = vmatpush1.msra.mxu0 0.0
        %1519 = vmatprep.subr.mxu0 0.0
        %1520 = vmatpush1.msra.mxu0 0.0
        %1521 = vmatprep.subr.mxu0 0.0
        %1522 = vmatpush1.msra.mxu0 0.0
        %1523 = vmatprep.subr.mxu0 0.0
        %1524 = vmatpush1.msra.mxu0 0.0
        %1525 = vmatprep.subr.mxu0 0.0
        %1526 = vmatpush1.msra.mxu0 0.0
        %1527 = vmatprep.subr.mxu0 0.0
        %1528 = vmatpush1.msra.mxu0 0.0
        %1529 = vmatprep.subr.mxu0 0.0
        %1530 = vmatpush1.msra.mxu0 0.0
        %1531 = vmatprep.subr.mxu0 0.0
        %1532 = vmatpush1.msra.mxu0 0.0
        %1533 = vmatprep.subr.mxu0 0.0
        %1534 = vmatpush1.msra.mxu0 0.0
        %1535 = vmatprep.subr.mxu0 0.0
        %1536 = vmatpush1.msra.mxu0 0.0
        %1537 = vmatprep.subr.mxu0 0.0
        %1538 = vmatpush1.msra.mxu0 0.0
        %1539 = vmatprep.subr.mxu0 0.0
        %1540 = vmatpush1.msra.mxu0 0.0
        %1541 = vmatprep.subr.mxu0 0.0
        %1542 = vmatpush1.msra.mxu0 0.0
        %1543 = vmatprep.mubr.f32.mxu0 0.0
        %v1544 = vand.u32 %v1215, 4294901760
        %v1545 = vsub.f32 %v1215, %v1544
        %v1546 = vand.u32 %v1545, 4294901760
        %1547 = vmatmul.mubr.f32.gmra.mrb[0].mxu0 %v1546
        %v1548 = vpop.f32.mrb[0].mxu0
        %v1549 = vadd.f32 %v1467, %v1548
        %v1550 = vpop.f32.mrb[0].mxu0
        %1551 = vmatprep.mubr.f32.mxu0 0.0
        %v1552 = vand.u32 %v1218, 4294901760
        %v1553 = vsub.f32 %v1218, %v1552
        %v1554 = vand.u32 %v1553, 4294901760
        %1555 = vmatmul.mubr.f32.gmra.mrb[0].mxu0 %v1554
        %v1556 = vpop.f32.mrb[0].mxu0
        %v1557 = vadd.f32 %v1474, %v1556
        %v1558 = vpop.f32.mrb[0].mxu0
        %1559 = vdwg.mxu0
        %1560 = vmatprep.subr.mxu0 0.0
        %v1561 = vand.u32 %v1211, 4294901760
        %v1562 = vsub.f32 %v1211, %v1561
        %v1563 = vand.u32 %v1562, 4294901760
        %1564 = vmatpush1.msra.mxu0 %v1563
        %1565 = vmatprep.subr.mxu0 0.0
        %v1566 = vand.u32 %v1212, 4294901760
        %v1567 = vsub.f32 %v1212, %v1566
        %v1568 = vand.u32 %v1567, 4294901760
        %1569 = vmatpush1.msra.mxu0 %v1568
        %1570 = vmatprep.subr.mxu0 0.0
        %1571 = vmatpush1.msra.mxu0 0.0
        %1572 = vmatprep.subr.mxu0 0.0
        %1573 = vmatpush1.msra.mxu0 0.0
        %1574 = vmatprep.subr.mxu0 0.0
        %1575 = vmatpush1.msra.mxu0 0.0
        %1576 = vmatprep.subr.mxu0 0.0
        %1577 = vmatpush1.msra.mxu0 0.0
        %1578 = vmatprep.subr.mxu0 0.0
        %1579 = vmatpush1.msra.mxu0 0.0
        %1580 = vmatprep.subr.mxu0 0.0
        %1581 = vmatpush1.msra.mxu0 0.0
        %1582 = vmatprep.subr.mxu0 0.0
        %1583 = vmatpush1.msra.mxu0 0.0
        %1584 = vmatprep.subr.mxu0 0.0
        %1585 = vmatpush1.msra.mxu0 0.0
        %1586 = vmatprep.subr.mxu0 0.0
        %1587 = vmatpush1.msra.mxu0 0.0
        %1588 = vmatprep.subr.mxu0 0.0
        %1589 = vmatpush1.msra.mxu0 0.0
        %1590 = vmatprep.subr.mxu0 0.0
        %1591 = vmatpush1.msra.mxu0 0.0
        %1592 = vmatprep.subr.mxu0 0.0
        %1593 = vmatpush1.msra.mxu0 0.0
        %1594 = vmatprep.subr.mxu0 0.0
        %1595 = vmatpush1.msra.mxu0 0.0
        %1596 = vmatprep.subr.mxu0 0.0
        %1597 = vmatpush1.msra.mxu0 0.0
        %1598 = vmatprep.subr.mxu0 0.0
        %1599 = vmatpush1.msra.mxu0 0.0
        %1600 = vmatprep.subr.mxu0 0.0
        %1601 = vmatpush1.msra.mxu0 0.0
        %1602 = vmatprep.subr.mxu0 0.0
        %1603 = vmatpush1.msra.mxu0 0.0
        %1604 = vmatprep.subr.mxu0 0.0
        %1605 = vmatpush1.msra.mxu0 0.0
        %1606 = vmatprep.subr.mxu0 0.0
        %1607 = vmatpush1.msra.mxu0 0.0
        %1608 = vmatprep.subr.mxu0 0.0
        %1609 = vmatpush1.msra.mxu0 0.0
        %1610 = vmatprep.subr.mxu0 0.0
        %1611 = vmatpush1.msra.mxu0 0.0
        %1612 = vmatprep.subr.mxu0 0.0
        %1613 = vmatpush1.msra.mxu0 0.0
        %1614 = vmatprep.subr.mxu0 0.0
        %1615 = vmatpush1.msra.mxu0 0.0
        %1616 = vmatprep.subr.mxu0 0.0
        %1617 = vmatpush1.msra.mxu0 0.0
        %1618 = vmatprep.subr.mxu0 0.0
        %1619 = vmatpush1.msra.mxu0 0.0
        %1620 = vmatprep.subr.mxu0 0.0
        %1621 = vmatpush1.msra.mxu0 0.0
        %1622 = vmatprep.subr.mxu0 0.0
        %1623 = vmatpush1.msra.mxu0 0.0
        %1624 = vmatprep.subr.mxu0 0.0
        %1625 = vmatpush1.msra.mxu0 0.0
        %1626 = vmatprep.subr.mxu0 0.0
        %1627 = vmatpush1.msra.mxu0 0.0
        %1628 = vmatprep.subr.mxu0 0.0
        %1629 = vmatpush1.msra.mxu0 0.0
        %1630 = vmatprep.mubr.f32.mxu0 0.0
        %v1631 = vand.u32 %v1215, 4294901760
        %1632 = vmatmul.mubr.f32.gmra.mrb[0].mxu0 %v1631
        %v1633 = vpop.f32.mrb[0].mxu0
        %v1634 = vadd.f32 %v1549, %v1633
        %v1635 = vpop.f32.mrb[0].mxu0
        %1636 = vmatprep.mubr.f32.mxu0 0.0
        %v1637 = vand.u32 %v1218, 4294901760
        %1638 = vmatmul.mubr.f32.gmra.mrb[0].mxu0 %v1637
        %v1639 = vpop.f32.mrb[0].mxu0
        %v1640 = vadd.f32 %v1557, %v1639
        %v1641 = vpop.f32.mrb[0].mxu0
        %1642 = vdwg.mxu0
        %1643 = vmatprep.subr.mxu0 0.0
        %v1644 = vand.u32 %v1211, 4294901760
        %1645 = vmatpush1.msra.mxu0 %v1644
        %1646 = vmatprep.subr.mxu0 0.0
        %v1647 = vand.u32 %v1212, 4294901760
        %1648 = vmatpush1.msra.mxu0 %v1647
        %1649 = vmatprep.subr.mxu0 0.0
        %1650 = vmatpush1.msra.mxu0 0.0
        %1651 = vmatprep.subr.mxu0 0.0
        %1652 = vmatpush1.msra.mxu0 0.0
        %1653 = vmatprep.subr.mxu0 0.0
        %1654 = vmatpush1.msra.mxu0 0.0
        %1655 = vmatprep.subr.mxu0 0.0
        %1656 = vmatpush1.msra.mxu0 0.0
        %1657 = vmatprep.subr.mxu0 0.0
        %1658 = vmatpush1.msra.mxu0 0.0
        %1659 = vmatprep.subr.mxu0 0.0
        %1660 = vmatpush1.msra.mxu0 0.0
        %1661 = vmatprep.subr.mxu0 0.0
        %1662 = vmatpush1.msra.mxu0 0.0
        %1663 = vmatprep.subr.mxu0 0.0
        %1664 = vmatpush1.msra.mxu0 0.0
        %1665 = vmatprep.subr.mxu0 0.0
        %1666 = vmatpush1.msra.mxu0 0.0
        %1667 = vmatprep.subr.mxu0 0.0
        %1668 = vmatpush1.msra.mxu0 0.0
        %1669 = vmatprep.subr.mxu0 0.0
        %1670 = vmatpush1.msra.mxu0 0.0
        %1671 = vmatprep.subr.mxu0 0.0
        %1672 = vmatpush1.msra.mxu0 0.0
        %1673 = vmatprep.subr.mxu0 0.0
        %1674 = vmatpush1.msra.mxu0 0.0
        %1675 = vmatprep.subr.mxu0 0.0
        %1676 = vmatpush1.msra.mxu0 0.0
        %1677 = vmatprep.subr.mxu0 0.0
        %1678 = vmatpush1.msra.mxu0 0.0
        %1679 = vmatprep.subr.mxu0 0.0
        %1680 = vmatpush1.msra.mxu0 0.0
        %1681 = vmatprep.subr.mxu0 0.0
        %1682 = vmatpush1.msra.mxu0 0.0
        %1683 = vmatprep.subr.mxu0 0.0
        %1684 = vmatpush1.msra.mxu0 0.0
        %1685 = vmatprep.subr.mxu0 0.0
        %1686 = vmatpush1.msra.mxu0 0.0
        %1687 = vmatprep.subr.mxu0 0.0
        %1688 = vmatpush1.msra.mxu0 0.0
        %1689 = vmatprep.subr.mxu0 0.0
        %1690 = vmatpush1.msra.mxu0 0.0
        %1691 = vmatprep.subr.mxu0 0.0
        %1692 = vmatpush1.msra.mxu0 0.0
        %1693 = vmatprep.subr.mxu0 0.0
        %1694 = vmatpush1.msra.mxu0 0.0
        %1695 = vmatprep.subr.mxu0 0.0
        %1696 = vmatpush1.msra.mxu0 0.0
        %1697 = vmatprep.subr.mxu0 0.0
        %1698 = vmatpush1.msra.mxu0 0.0
        %1699 = vmatprep.subr.mxu0 0.0
        %1700 = vmatpush1.msra.mxu0 0.0
        %1701 = vmatprep.subr.mxu0 0.0
        %1702 = vmatpush1.msra.mxu0 0.0
        %1703 = vmatprep.subr.mxu0 0.0
        %1704 = vmatpush1.msra.mxu0 0.0
        %1705 = vmatprep.subr.mxu0 0.0
        %1706 = vmatpush1.msra.mxu0 0.0
        %1707 = vmatprep.subr.mxu0 0.0
        %1708 = vmatpush1.msra.mxu0 0.0
        %1709 = vmatprep.mubr.f32.mxu0 0.0
        %v1710 = vand.u32 %v1215, 4294901760
        %1711 = vmatmul.mubr.f32.gmra.mrb[0].mxu0 %v1710
        %v1712 = vpop.f32.mrb[0].mxu0
        %v1713 = vadd.f32 %v1634, %v1712
        %v1714 = vpop.f32.mrb[0].mxu0
        %1715 = vmatprep.mubr.f32.mxu0 0.0
        %v1716 = vand.u32 %v1218, 4294901760
        %1717 = vmatmul.mubr.f32.gmra.mrb[0].mxu0 %v1716
        %v1718 = vpop.f32.mrb[0].mxu0
        %v1719 = vadd.f32 %v1640, %v1718
        %v1720 = vpop.f32.mrb[0].mxu0
        %1721 = vdwg.mxu0
        %1723 = vset.pattern.permute.xlu0 0
        %1724 = vperm.xlu0 %1723, %v1209
        %v1725 = vpop.permute.xlu0 %1724
        %1728 = vset.pattern.permute.xlu0 0
        %1729 = vperm.xlu0 %1728, %v1210
        %v1730 = vpop.permute.xlu0 %1729
        %v1732 = vmul.f32 %v1713, %v1725
        %v1733 = vmul.f32 %v1719, %v1730
        %v1734 = vadd.f32 %v1732, %v1733
        %v1735 = vrot.slane %v1734, 4
        %v1736 = vadd.f32 %v1734, %v1735
        %v1737 = vrot.slane %v1736, 2
        %v1738 = vadd.f32 %v1736, %v1737
        %v1739 = vrot.slane %v1738, 1
        %v1740 = vadd.f32 %v1738, %v1739
        %s1741 = sld [smem:[#allocation2 + $0x2]]
        %v1742 = vstv %s1741
        %v1743 = vadd.f32 %v1740, %v1742
        %1744 = vst [vmem:[%s593] sm:$0x1] %v1743
        %s1745 = sld [smem:[#allocation2 + $0x5]]
        %v1746 = vstv %s1745
        %v1747 = vmul.f32 %v1743, %v1746
        %v1748 = vadd.f32 %v1206, %v1747
        %s1749 = sld [smem:[#allocation2 + $0x6]]
        %v1750 = vstv %s1749
        %v1751 = vadd.f32 %v1748, %v1750
        %1752 = vst [vmem:[%s599] sm:$0x1] %v1751
        %s1753 = sand.u32 %s278, 1
        %s1754 = scalar_lea.sflag [#allocation4], %s1753
        %s1755 = sand.u32 %s278, 1
        %s1756 = scalar_lea.vmem [#allocation10], %s1755
        %s1757 = sand.u32 %s40, 1
        %s1758 = scalar_lea.sflag [#allocation12], %s1757
        %s1759 = sand.u32 %s306, 1
        %s1760 = scalar_lea.vmem [#allocation11], %s1759
        %s1761 = sand.u32 %s40, 1
        %s1762 = scalar_lea.sflag [#allocation12], %s1761
        %s1763 = sand.u32 %s334, 1
        %s1764 = scalar_lea.vmem [#allocation13], %s1763
        %s1765 = sand.u32 %s362, 1
        %s1766 = scalar_lea.sflag [#allocation15], %s1765
        %s1767 = sand.u32 %s362, 1
        %s1768 = scalar_lea.vmem [#allocation14], %s1767
        // Predicated region
        $region73: #{tpu_custom_call.1} parent=55 // pred_check
          %p1769 = pneg %p288
        $region74: #{tpu_custom_call.1} parent=55 // pred_check_branch
          %1771 = sbr.rel (%p1769) target = $region76
        $region75: #{tpu_custom_call.1} parent=55 // pred_region
          %s1773 = ssub.s32 16, 16
          %1774 = vsyncadd %s1754, %s1773
          %s1775 = smul.addr %s44, 2
          %s1776 = sadd.s32 %s45, %s1775
          %s1777 = smul.addr %s1776, 16
          %s1778 = scalar_lea.hbm %s9, %s1777
          %s1780 = sshll.u32 %s1756, 4
          %s1781 = int_to_ptr.vmem [resolvable:$true] %s1780
          %1783 = dma.vmem_to_hbm [thread:$0]  %s1781, 16, %s1778, %s1754
        $region76: #{tpu_custom_call.1} parent=55 // pred_fallthru
          _
        // Predicated region
        $region77: #{tpu_custom_call.1} parent=55 // pred_check
          %p1784 = pneg %p316
        $region78: #{tpu_custom_call.1} parent=55 // pred_check_branch
          %1786 = sbr.rel (%p1784) target = $region80
        $region79: #{tpu_custom_call.1} parent=55 // pred_region
          %s1788 = ssub.s32 16, 16
          %1789 = vsyncadd %s1758, %s1788
          %s1790 = smul.addr %s44, 2
          %s1791 = sadd.s32 %s45, %s1790
          %s1792 = smul.addr %s1791, 16
          %s1793 = scalar_lea.hbm %s10, %s1792
          %s1795 = sshll.u32 %s1760, 4
          %s1796 = int_to_ptr.vmem [resolvable:$true] %s1795
          %1798 = dma.vmem_to_hbm [thread:$0]  %s1796, 16, %s1793, %s1758
        $region80: #{tpu_custom_call.1} parent=55 // pred_fallthru
          _
        // Predicated region
        $region81: #{tpu_custom_call.1} parent=55 // pred_check
          %p1799 = pneg %p344
        $region82: #{tpu_custom_call.1} parent=55 // pred_check_branch
          %1801 = sbr.rel (%p1799) target = $region84
        $region83: #{tpu_custom_call.1} parent=55 // pred_region
          %s1803 = ssub.s32 16, 16
          %1804 = vsyncadd %s1762, %s1803
          %s1805 = smul.addr %s44, 2
          %s1806 = sadd.s32 %s45, %s1805
          %s1807 = smul.addr %s1806, 16
          %s1808 = scalar_lea.hbm %s11, %s1807
          %s1810 = sshll.u32 %s1764, 4
          %s1811 = int_to_ptr.vmem [resolvable:$true] %s1810
          %1813 = dma.vmem_to_hbm [thread:$0]  %s1811, 16, %s1808, %s1762
        $region84: #{tpu_custom_call.1} parent=55 // pred_fallthru
          _
        // Predicated region
        $region85: #{tpu_custom_call.1} parent=55 // pred_check
          %p1814 = pneg %p372
        $region86: #{tpu_custom_call.1} parent=55 // pred_check_branch
          %1816 = sbr.rel (%p1814) target = $region88
        $region87: #{tpu_custom_call.1} parent=55 // pred_region
          %s1818 = ssub.s32 16, 16
          %1819 = vsyncadd %s1766, %s1818
          %s1820 = smul.addr %s44, 2
          %s1821 = sadd.s32 %s45, %s1820
          %s1822 = smul.addr %s1821, 16
          %s1823 = scalar_lea.hbm %s12, %s1822
          %s1825 = sshll.u32 %s1768, 4
          %s1826 = int_to_ptr.vmem [resolvable:$true] %s1825
          %1828 = dma.vmem_to_hbm [thread:$0]  %s1826, 16, %s1823, %s1766
        $region88: #{tpu_custom_call.1} parent=55 // pred_fallthru
          _
      $region56: #{tpu_custom_call.1} parent=5 // pred_fallthru
        _
      %p1829 = scmp.le.s32.totalorder 2, %s35
      // Predicated region
      $region89: #{tpu_custom_call.1} parent=5 // pred_check
        %p1830 = pneg %p1829
      $region90: #{tpu_custom_call.1} parent=5 // pred_check_branch
        %1832 = sbr.rel (%p1830) target = $region92
      $region91: #{tpu_custom_call.1} parent=5 // pred_region
        %s1833 = ssub.s32 %s35, 2
        // Predicated region
        $region93: #{tpu_custom_call.1} parent=91 // pred_check
          %p1834 = pneg %p294
        $region94: #{tpu_custom_call.1} parent=91 // pred_check_branch
          %1836 = sbr.rel (%p1834) target = $region96
        $region95: #{tpu_custom_call.1} parent=91 // pred_region
          %s1837 = sand.u32 %s279, 1
          %s1838 = scalar_lea.sflag [#allocation4], %s1837
          %s1839 = sand.u32 %s279, 1
          %s1840 = scalar_lea.vmem [#allocation10], %s1839
          %1841 = dma.done %s1838, 16
        $region96: #{tpu_custom_call.1} parent=91 // pred_fallthru
          _
        // Predicated region
        $region97: #{tpu_custom_call.1} parent=91 // pred_check
          %p1842 = pneg %p322
        $region98: #{tpu_custom_call.1} parent=91 // pred_check_branch
          %1844 = sbr.rel (%p1842) target = $region100
        $region99: #{tpu_custom_call.1} parent=91 // pred_region
          %s1845 = sand.u32 %s41, 1
          %s1846 = scalar_lea.sflag [#allocation12], %s1845
          %s1847 = sand.u32 %s307, 1
          %s1848 = scalar_lea.vmem [#allocation11], %s1847
          %1849 = dma.done %s1846, 16
        $region100: #{tpu_custom_call.1} parent=91 // pred_fallthru
          _
        // Predicated region
        $region101: #{tpu_custom_call.1} parent=91 // pred_check
          %p1850 = pneg %p350
        $region102: #{tpu_custom_call.1} parent=91 // pred_check_branch
          %1852 = sbr.rel (%p1850) target = $region104
        $region103: #{tpu_custom_call.1} parent=91 // pred_region
          %s1853 = sand.u32 %s41, 1
          %s1854 = scalar_lea.sflag [#allocation12], %s1853
          %s1855 = sand.u32 %s335, 1
          %s1856 = scalar_lea.vmem [#allocation13], %s1855
          %1857 = dma.done %s1854, 16
        $region104: #{tpu_custom_call.1} parent=91 // pred_fallthru
          _
        // Predicated region
        $region105: #{tpu_custom_call.1} parent=91 // pred_check
          %p1858 = pneg %p378
        $region106: #{tpu_custom_call.1} parent=91 // pred_check_branch
          %1860 = sbr.rel (%p1858) target = $region108
        $region107: #{tpu_custom_call.1} parent=91 // pred_region
          %s1861 = sand.u32 %s363, 1
          %s1862 = scalar_lea.sflag [#allocation15], %s1861
          %s1863 = sand.u32 %s363, 1
          %s1864 = scalar_lea.vmem [#allocation14], %s1863
          %1865 = dma.done %s1862, 16
        $region108: #{tpu_custom_call.1} parent=91 // pred_fallthru
          _
      $region92: #{tpu_custom_call.1} parent=5 // pred_fallthru
        _
    $region6: #{tpu_custom_call.1} parent=1 // loop_footer
      %s39 = sadd.s32 1, %s35
    $region7: #{tpu_custom_call.1} parent=1 // loop_footer_branch
      %34 = sbr.rel target = $region3
    $region8: #{tpu_custom_call.1} parent=1 // loop_exit
      _
    %1866 = vsyncpa [#allocation3], 1
    %s1867 = scalar_lea.sflag [#allocation3], 1
    %1868 = vsyncpa %s1867, 1
    %1869 = vsyncpa [#allocation8], 1
    %s1870 = scalar_lea.sflag [#allocation8], 1
    %1871 = vsyncpa %s1870, 1
    %1872 = vsyncpa [#allocation4], 1
    %s1873 = scalar_lea.sflag [#allocation4], 1
    %1874 = vsyncpa %s1873, 1
    %1875 = vsyncpa [#allocation12], 1
    %s1876 = scalar_lea.sflag [#allocation12], 1
    %1877 = vsyncpa %s1876, 1
    %1878 = vsyncpa [#allocation15], 1
    %s1879 = scalar_lea.sflag [#allocation15], 1
    %1880 = vsyncpa %s1879, 1
    %1881 = vsyncpa [#allocation5], 1
    %s1882 = scalar_lea.sflag [#allocation5], 1
    %1883 = vsyncpa %s1882, 1

</llo_original>
